<compile_context>
chip_gen: v7x
topology: tpu7x:2x2x1
jax: 0.10.0
libtpu: 0.0.40
codegen_flags: <defaults>
</compile_context>

<pallas_src>
import functools

import jax
import jax.numpy as jnp
from jax import lax
from jax.experimental import pallas as pl
from jax.experimental.pallas import tpu as pltpu


def _round_up(x: int, m: int) -> int:
    return ((x + m - 1) // m) * m


def _skeleton_loss_kernel(scores_ref, yy_ref, out_ref,
                          ps_ref, pc_ref, zs_ref, zc_ref, *, num_rows):
    """Streaming masked-sum reduction over full-width row blocks.

    Grid = (num_blocks,)  -- sequential reduction axis ("arbitrary").

    VMEM scratch (f32[8, W] each):
      ps = sum of scores where yy > 0     pc = count of yy > 0
      zs = sum of scores where yy == 0    zc = count of yy == 0

    Output: f32[1, 4] = [pos_sum, pos_cnt, zero_sum, zero_cnt] (SMEM),
    combined and divided in the JAX wrapper.
    """
    i = pl.program_id(0)
    last = pl.num_programs(0) - 1
    tile_h, w = scores_ref.shape
    has_ragged = (num_rows % tile_h) != 0          # static Python bool

    @pl.when(i == 0)
    def _init():
        ps_ref[...] = jnp.zeros_like(ps_ref)
        pc_ref[...] = jnp.zeros_like(pc_ref)
        zs_ref[...] = jnp.zeros_like(zs_ref)
        zc_ref[...] = jnp.zeros_like(zc_ref)

    s = scores_ref[...].astype(jnp.float32)
    y = yy_ref[...]                                # native dtype (f32 / int / ...)
    pos = y > 0
    zero = y == 0

    def fold(x):                                   # (tile_h, w) -> (8, w): VPU adds only
        return jnp.sum(x.reshape(tile_h // 8, 8, w), axis=0)

    def accumulate(p, z):
        # `where` selects (not multiplies), so garbage scores in masked-off
        # rows cannot poison the sums even if they are NaN/Inf.
        ps_ref[...] += fold(jnp.where(p, s, 0.0))
        pc_ref[...] += fold(p.astype(jnp.float32))
        zs_ref[...] += fold(jnp.where(z, s, 0.0))
        zc_ref[...] += fold(z.astype(jnp.float32))

    if has_ragged:
        # Only the single ragged (last) block pays for the validity mask; the
        # mask is a (tile_h, 1) column that broadcasts through the boolean AND.
        @pl.when(i == last)
        def _ragged():
            row = i * tile_h + lax.broadcasted_iota(jnp.int32, (tile_h, 1), 0)
            valid = row < num_rows
            accumulate(pos & valid, zero & valid)

        @pl.when(i != last)
        def _full():
            accumulate(pos, zero)
    else:
        accumulate(pos, zero)

    @pl.when(i == last)
    def _finalize():
        out_ref[0, 0] = jnp.sum(ps_ref[...])
        out_ref[0, 1] = jnp.sum(pc_ref[...])
        out_ref[0, 2] = jnp.sum(zs_ref[...])
        out_ref[0, 3] = jnp.sum(zc_ref[...])


def skeleton_based_loss(skeleton_scores, yy, y_t1=None, *, target_block_bytes=None):
    """skeleton_scores: [1, 1, H, W] scores (NCHW); yy: [H, W] labels; y_t1: unused.

    Returns -mean(scores[yy > 0]) + mean(scores[yy == 0]) as an f32 scalar.
    If either class is empty the result is Inf/NaN, matching torch.mean of an
    empty selection.
    """
    del y_t1  # squeezed in the reference code but never used in the loss
    scores_2d = skeleton_scores[0, 0]              # [H, W] (no-op reshape of the buffer)
    H, W = scores_2d.shape

    # ---- generation-aware tiling -------------------------------------------
    try:
        phys_vmem = int(pltpu.get_tpu_info().vmem_capacity_bytes)
    except Exception:                              # pragma: no cover - conservative fallback
        phys_vmem = 64 << 20                       # v7x-sized assumption

    if target_block_bytes is None:
        # Per-step *input* bytes (scores + labels).  Double-buffered working
        # set = 2x this, which stays well under physical VMEM on every chip:
        #   v5e/v6e: 128 MiB phys -> ~32 MiB blocks;  v7x: 64 MiB -> ~16 MiB.
        target_block_bytes = phys_vmem // 4

    bytes_per_row = W * (scores_2d.dtype.itemsize + yy.dtype.itemsize)
    # Rows per block: multiple of 32 (covers int8 sublane packing and f32's 8).
    target_rows = max(32, (target_block_bytes // bytes_per_row) // 32 * 32)
    tile_h = min(target_rows, _round_up(H, 32))
    num_blocks = pl.cdiv(H, tile_h)

    block_bytes = tile_h * bytes_per_row           # one double-buffer slot of inputs
    acc_bytes = 4 * (8 * W * 4)                    # four (8, W) f32 accumulators
    vmem_limit = 2 * block_bytes + acc_bytes + (4 << 20)
    vmem_limit = int(min(max(vmem_limit, 16 << 20), phys_vmem))

    kernel = functools.partial(_skeleton_loss_kernel, num_rows=H)

    parts = pl.pallas_call(
        kernel,
        out_shape=jax.ShapeDtypeStruct((1, 4), jnp.float32),
        grid_spec=pltpu.PrefetchScalarGridSpec(
            num_scalar_prefetch=0,
            grid=(num_blocks,),
            in_specs=[
                pl.BlockSpec((tile_h, W), lambda i: (i, 0)),   # scores
                pl.BlockSpec((tile_h, W), lambda i: (i, 0)),   # labels (native dtype)
            ],
            out_specs=pl.BlockSpec((1, 4), lambda i: (0, 0),
                                   memory_space=pltpu.SMEM),
            scratch_shapes=[pltpu.VMEM((8, W), jnp.float32)] * 4,
        ),
        compiler_params=pltpu.CompilerParams(
            dimension_semantics=("arbitrary",),
            vmem_limit_bytes=vmem_limit,
        ),
    )(scores_2d, yy)

    tot = parts[0]                                 # [pos_sum, pos_cnt, zero_sum, zero_cnt]
    return -tot[0] / tot[1] + tot[2] / tot[3]


if __name__ == "__main__":
    key = jax.random.PRNGKey(0)
    k1, k2 = jax.random.split(key)

    # Small, deliberately ragged plane: H not a multiple of 32, W = 2 lane tiles.
    H, W = 200, 256
    skeleton_scores = jax.random.normal(k1, (1, 1, H, W), dtype=jnp.float32)   # NCHW
    yy = jax.random.randint(k2, (H, W), 0, 3).astype(jnp.float32)              # labels {0,1,2}
    y_t1 = jnp.zeros((1, H, W), dtype=jnp.float32)                             # unused by the loss

    loss = skeleton_based_loss(skeleton_scores, yy, y_t1)
    loss = jax.block_until_ready(loss)

    # Pure-JAX reference check
    s = skeleton_scores[0, 0]
    ref = -jnp.mean(s, where=(yy > 0)) + jnp.mean(s, where=(yy == 0))
    assert jnp.allclose(loss, ref, rtol=1e-4, atol=1e-5), (loss, ref)

    print("KERNEL_OK")
</pallas_src>

<mosaic_0001>
module attributes {stable_mosaic.version = 11 : i64} {
  func.func @_skeleton_loss_kernel(%arg0: i32, %arg1: memref<224x256xf32, #tpu.memory_space<vmem>>, %arg2: memref<224x256xf32, #tpu.memory_space<vmem>>, %arg3: memref<1x4xf32, #tpu.memory_space<smem>>, %arg4: memref<8x256xf32, #tpu.memory_space<vmem>>, %arg5: memref<8x256xf32, #tpu.memory_space<vmem>>, %arg6: memref<8x256xf32, #tpu.memory_space<vmem>>, %arg7: memref<8x256xf32, #tpu.memory_space<vmem>>) attributes {dimension_semantics = [#tpu.dimension_semantics<arbitrary>], iteration_bounds = array<i64: 1>, scalar_prefetch = 0 : i64, scratch_operands = 4 : i64, tpu.core_type = #tpu.core_type<tc>, window_params = [{transform_indices = @transform_0, window_bounds = array<i64: 224, 256>}, {transform_indices = @transform_1, window_bounds = array<i64: 224, 256>}, {transform_indices = @transform_2, window_bounds = array<i64: 1, 4>}]} {
    %c0_i32 = arith.constant 0 : i32
    %0 = arith.cmpi eq, %arg0, %c0_i32 : i32
    %1 = arith.extui %0 : i1 to i32
    %c0_i32_0 = arith.constant 0 : i32
    %2 = arith.cmpi ne, %1, %c0_i32_0 : i32
    scf.if %2 {
      %cst_11 = arith.constant 0.000000e+00 : f32
      %18 = vector.broadcast %cst_11 : f32 to vector<8x256xf32>
      %c0_12 = arith.constant 0 : index
      %c0_13 = arith.constant 0 : index
      %19 = vector.load %arg4[%c0_12, %c0_13] : memref<8x256xf32, #tpu.memory_space<vmem>>, vector<8x256xf32>
      tpu.vector_store %arg4[%c0_12, %c0_13], %18 {strides = array<i32>} : memref<8x256xf32, #tpu.memory_space<vmem>>, vector<8x256xf32>,
      %cst_14 = arith.constant 0.000000e+00 : f32
      %20 = vector.broadcast %cst_14 : f32 to vector<8x256xf32>
      %c0_15 = arith.constant 0 : index
      %c0_16 = arith.constant 0 : index
      %21 = vector.load %arg5[%c0_15, %c0_16] : memref<8x256xf32, #tpu.memory_space<vmem>>, vector<8x256xf32>
      tpu.vector_store %arg5[%c0_15, %c0_16], %20 {strides = array<i32>} : memref<8x256xf32, #tpu.memory_space<vmem>>, vector<8x256xf32>,
      %cst_17 = arith.constant 0.000000e+00 : f32
      %22 = vector.broadcast %cst_17 : f32 to vector<8x256xf32>
      %c0_18 = arith.constant 0 : index
      %c0_19 = arith.constant 0 : index
      %23 = vector.load %arg6[%c0_18, %c0_19] : memref<8x256xf32, #tpu.memory_space<vmem>>, vector<8x256xf32>
      tpu.vector_store %arg6[%c0_18, %c0_19], %22 {strides = array<i32>} : memref<8x256xf32, #tpu.memory_space<vmem>>, vector<8x256xf32>,
      %cst_20 = arith.constant 0.000000e+00 : f32
      %24 = vector.broadcast %cst_20 : f32 to vector<8x256xf32>
      %c0_21 = arith.constant 0 : index
      %c0_22 = arith.constant 0 : index
      %25 = vector.load %arg7[%c0_21, %c0_22] : memref<8x256xf32, #tpu.memory_space<vmem>>, vector<8x256xf32>
      tpu.vector_store %arg7[%c0_21, %c0_22], %24 {strides = array<i32>} : memref<8x256xf32, #tpu.memory_space<vmem>>, vector<8x256xf32>,
    } else {
    }
    %c0 = arith.constant 0 : index
    %c0_1 = arith.constant 0 : index
    %3 = vector.load %arg1[%c0, %c0_1] : memref<224x256xf32, #tpu.memory_space<vmem>>, vector<224x256xf32>
    %c0_2 = arith.constant 0 : index
    %c0_3 = arith.constant 0 : index
    %4 = vector.load %arg2[%c0_2, %c0_3] : memref<224x256xf32, #tpu.memory_space<vmem>>, vector<224x256xf32>
    %cst = arith.constant 0.000000e+00 : f32
    %5 = vector.broadcast %cst : f32 to vector<224x256xf32>
    %6 = arith.cmpf ogt, %4, %5 : vector<224x256xf32>
    %cst_4 = arith.constant 0.000000e+00 : f32
    %7 = vector.broadcast %cst_4 : f32 to vector<224x256xf32>
    %8 = arith.cmpf oeq, %4, %7 : vector<224x256xf32>
    %c0_i32_5 = arith.constant 0 : i32
    %9 = arith.cmpi eq, %arg0, %c0_i32_5 : i32
    %10 = arith.extui %9 : i1 to i32
    %c0_i32_6 = arith.constant 0 : i32
    %11 = arith.cmpi ne, %10, %c0_i32_6 : i32
    scf.if %11 {
      %c224_i32 = arith.constant 224 : i32
      %18 = arith.muli %arg0, %c224_i32 : i32
      %19 = tpu.iota {dimensions = array<i32: 0>} : vector<224x1xi32>
      %20 = vector.broadcast %18 : i32 to vector<224x1xi32>
      %21 = arith.addi %20, %19 : vector<224x1xi32>
      %c200_i32 = arith.constant 200 : i32
      %22 = vector.broadcast %c200_i32 : i32 to vector<224x1xi32>
      %23 = arith.cmpi slt, %21, %22 : vector<224x1xi32>
      %24 = vector.broadcast %23 : vector<224x1xi1> to vector<224x256xi1>
      %25 = arith.andi %6, %24 : vector<224x256xi1>
      %26 = vector.broadcast %23 : vector<224x1xi1> to vector<224x256xi1>
      %27 = arith.andi %8, %26 : vector<224x256xi1>
      %c0_11 = arith.constant 0 : index
      %c0_12 = arith.constant 0 : index
      %28 = vector.load %arg4[%c0_11, %c0_12] : memref<8x256xf32, #tpu.memory_space<vmem>>, vector<8x256xf32>
      %cst_13 = arith.constant 0.000000e+00 : f32
      %29 = vector.broadcast %cst_13 : f32 to vector<224x256xf32>
      %30 = arith.select %25, %3, %29 : vector<224x256xi1>, vector<224x256xf32>
      %31 = vector.shape_cast %30 : vector<224x256xf32> to vector<28x8x256xf32>
      %cst_14 = arith.constant dense<0.000000e+00> : vector<8x256xf32>
      %32 = vector.multi_reduction <add>, %31, %cst_14 [0] : vector<28x8x256xf32> to vector<8x256xf32>
      %33 = arith.addf %28, %32 : vector<8x256xf32>
      %c0_15 = arith.constant 0 : index
      %c0_16 = arith.constant 0 : index
      %34 = vector.load %arg4[%c0_15, %c0_16] : memref<8x256xf32, #tpu.memory_space<vmem>>, vector<8x256xf32>
      tpu.vector_store %arg4[%c0_15, %c0_16], %33 {strides = array<i32>} : memref<8x256xf32, #tpu.memory_space<vmem>>, vector<8x256xf32>,
      %c0_17 = arith.constant 0 : index
      %c0_18 = arith.constant 0 : index
      %35 = vector.load %arg5[%c0_17, %c0_18] : memref<8x256xf32, #tpu.memory_space<vmem>>, vector<8x256xf32>
      %36 = arith.extui %25 : vector<224x256xi1> to vector<224x256xi32>
      %37 = arith.sitofp %36 : vector<224x256xi32> to vector<224x256xf32>
      %38 = vector.shape_cast %37 : vector<224x256xf32> to vector<28x8x256xf32>
      %cst_19 = arith.constant dense<0.000000e+00> : vector<8x256xf32>
      %39 = vector.multi_reduction <add>, %38, %cst_19 [0] : vector<28x8x256xf32> to vector<8x256xf32>
      %40 = arith.addf %35, %39 : vector<8x256xf32>
      %c0_20 = arith.constant 0 : index
      %c0_21 = arith.constant 0 : index
      %41 = vector.load %arg5[%c0_20, %c0_21] : memref<8x256xf32, #tpu.memory_space<vmem>>, vector<8x256xf32>
      tpu.vector_store %arg5[%c0_20, %c0_21], %40 {strides = array<i32>} : memref<8x256xf32, #tpu.memory_space<vmem>>, vector<8x256xf32>,
      %c0_22 = arith.constant 0 : index
      %c0_23 = arith.constant 0 : index
      %42 = vector.load %arg6[%c0_22, %c0_23] : memref<8x256xf32, #tpu.memory_space<vmem>>, vector<8x256xf32>
      %cst_24 = arith.constant 0.000000e+00 : f32
      %43 = vector.broadcast %cst_24 : f32 to vector<224x256xf32>
      %44 = arith.select %27, %3, %43 : vector<224x256xi1>, vector<224x256xf32>
      %45 = vector.shape_cast %44 : vector<224x256xf32> to vector<28x8x256xf32>
      %cst_25 = arith.constant dense<0.000000e+00> : vector<8x256xf32>
      %46 = vector.multi_reduction <add>, %45, %cst_25 [0] : vector<28x8x256xf32> to vector<8x256xf32>
      %47 = arith.addf %42, %46 : vector<8x256xf32>
      %c0_26 = arith.constant 0 : index
      %c0_27 = arith.constant 0 : index
      %48 = vector.load %arg6[%c0_26, %c0_27] : memref<8x256xf32, #tpu.memory_space<vmem>>, vector<8x256xf32>
      tpu.vector_store %arg6[%c0_26, %c0_27], %47 {strides = array<i32>} : memref<8x256xf32, #tpu.memory_space<vmem>>, vector<8x256xf32>,
      %c0_28 = arith.constant 0 : index
      %c0_29 = arith.constant 0 : index
      %49 = vector.load %arg7[%c0_28, %c0_29] : memref<8x256xf32, #tpu.memory_space<vmem>>, vector<8x256xf32>
      %50 = arith.extui %27 : vector<224x256xi1> to vector<224x256xi32>
      %51 = arith.sitofp %50 : vector<224x256xi32> to vector<224x256xf32>
      %52 = vector.shape_cast %51 : vector<224x256xf32> to vector<28x8x256xf32>
      %cst_30 = arith.constant dense<0.000000e+00> : vector<8x256xf32>
      %53 = vector.multi_reduction <add>, %52, %cst_30 [0] : vector<28x8x256xf32> to vector<8x256xf32>
      %54 = arith.addf %49, %53 : vector<8x256xf32>
      %c0_31 = arith.constant 0 : index
      %c0_32 = arith.constant 0 : index
      %55 = vector.load %arg7[%c0_31, %c0_32] : memref<8x256xf32, #tpu.memory_space<vmem>>, vector<8x256xf32>
      tpu.vector_store %arg7[%c0_31, %c0_32], %54 {strides = array<i32>} : memref<8x256xf32, #tpu.memory_space<vmem>>, vector<8x256xf32>,
    } else {
    }
    %c0_i32_7 = arith.constant 0 : i32
    %12 = arith.cmpi ne, %arg0, %c0_i32_7 : i32
    %13 = arith.extui %12 : i1 to i32
    %c0_i32_8 = arith.constant 0 : i32
    %14 = arith.cmpi ne, %13, %c0_i32_8 : i32
    scf.if %14 {
      %c0_11 = arith.constant 0 : index
      %c0_12 = arith.constant 0 : index
      %18 = vector.load %arg4[%c0_11, %c0_12] : memref<8x256xf32, #tpu.memory_space<vmem>>, vector<8x256xf32>
      %cst_13 = arith.constant 0.000000e+00 : f32
      %19 = vector.broadcast %cst_13 : f32 to vector<224x256xf32>
      %20 = arith.select %6, %3, %19 : vector<224x256xi1>, vector<224x256xf32>
      %21 = vector.shape_cast %20 : vector<224x256xf32> to vector<28x8x256xf32>
      %cst_14 = arith.constant dense<0.000000e+00> : vector<8x256xf32>
      %22 = vector.multi_reduction <add>, %21, %cst_14 [0] : vector<28x8x256xf32> to vector<8x256xf32>
      %23 = arith.addf %18, %22 : vector<8x256xf32>
      %c0_15 = arith.constant 0 : index
      %c0_16 = arith.constant 0 : index
      %24 = vector.load %arg4[%c0_15, %c0_16] : memref<8x256xf32, #tpu.memory_space<vmem>>, vector<8x256xf32>
      tpu.vector_store %arg4[%c0_15, %c0_16], %23 {strides = array<i32>} : memref<8x256xf32, #tpu.memory_space<vmem>>, vector<8x256xf32>,
      %c0_17 = arith.constant 0 : index
      %c0_18 = arith.constant 0 : index
      %25 = vector.load %arg5[%c0_17, %c0_18] : memref<8x256xf32, #tpu.memory_space<vmem>>, vector<8x256xf32>
      %26 = arith.extui %6 : vector<224x256xi1> to vector<224x256xi32>
      %27 = arith.sitofp %26 : vector<224x256xi32> to vector<224x256xf32>
      %28 = vector.shape_cast %27 : vector<224x256xf32> to vector<28x8x256xf32>
      %cst_19 = arith.constant dense<0.000000e+00> : vector<8x256xf32>
      %29 = vector.multi_reduction <add>, %28, %cst_19 [0] : vector<28x8x256xf32> to vector<8x256xf32>
      %30 = arith.addf %25, %29 : vector<8x256xf32>
      %c0_20 = arith.constant 0 : index
      %c0_21 = arith.constant 0 : index
      %31 = vector.load %arg5[%c0_20, %c0_21] : memref<8x256xf32, #tpu.memory_space<vmem>>, vector<8x256xf32>
      tpu.vector_store %arg5[%c0_20, %c0_21], %30 {strides = array<i32>} : memref<8x256xf32, #tpu.memory_space<vmem>>, vector<8x256xf32>,
      %c0_22 = arith.constant 0 : index
      %c0_23 = arith.constant 0 : index
      %32 = vector.load %arg6[%c0_22, %c0_23] : memref<8x256xf32, #tpu.memory_space<vmem>>, vector<8x256xf32>
      %cst_24 = arith.constant 0.000000e+00 : f32
      %33 = vector.broadcast %cst_24 : f32 to vector<224x256xf32>
      %34 = arith.select %8, %3, %33 : vector<224x256xi1>, vector<224x256xf32>
      %35 = vector.shape_cast %34 : vector<224x256xf32> to vector<28x8x256xf32>
      %cst_25 = arith.constant dense<0.000000e+00> : vector<8x256xf32>
      %36 = vector.multi_reduction <add>, %35, %cst_25 [0] : vector<28x8x256xf32> to vector<8x256xf32>
      %37 = arith.addf %32, %36 : vector<8x256xf32>
      %c0_26 = arith.constant 0 : index
      %c0_27 = arith.constant 0 : index
      %38 = vector.load %arg6[%c0_26, %c0_27] : memref<8x256xf32, #tpu.memory_space<vmem>>, vector<8x256xf32>
      tpu.vector_store %arg6[%c0_26, %c0_27], %37 {strides = array<i32>} : memref<8x256xf32, #tpu.memory_space<vmem>>, vector<8x256xf32>,
      %c0_28 = arith.constant 0 : index
      %c0_29 = arith.constant 0 : index
      %39 = vector.load %arg7[%c0_28, %c0_29] : memref<8x256xf32, #tpu.memory_space<vmem>>, vector<8x256xf32>
      %40 = arith.extui %8 : vector<224x256xi1> to vector<224x256xi32>
      %41 = arith.sitofp %40 : vector<224x256xi32> to vector<224x256xf32>
      %42 = vector.shape_cast %41 : vector<224x256xf32> to vector<28x8x256xf32>
      %cst_30 = arith.constant dense<0.000000e+00> : vector<8x256xf32>
      %43 = vector.multi_reduction <add>, %42, %cst_30 [0] : vector<28x8x256xf32> to vector<8x256xf32>
      %44 = arith.addf %39, %43 : vector<8x256xf32>
      %c0_31 = arith.constant 0 : index
      %c0_32 = arith.constant 0 : index
      %45 = vector.load %arg7[%c0_31, %c0_32] : memref<8x256xf32, #tpu.memory_space<vmem>>, vector<8x256xf32>
      tpu.vector_store %arg7[%c0_31, %c0_32], %44 {strides = array<i32>} : memref<8x256xf32, #tpu.memory_space<vmem>>, vector<8x256xf32>,
    } else {
    }
    %c0_i32_9 = arith.constant 0 : i32
    %15 = arith.cmpi eq, %arg0, %c0_i32_9 : i32
    %16 = arith.extui %15 : i1 to i32
    %c0_i32_10 = arith.constant 0 : i32
    %17 = arith.cmpi ne, %16, %c0_i32_10 : i32
    scf.if %17 {
      %c0_11 = arith.constant 0 : index
      %c0_12 = arith.constant 0 : index
      %18 = vector.load %arg4[%c0_11, %c0_12] : memref<8x256xf32, #tpu.memory_space<vmem>>, vector<8x256xf32>
      %19 = vector.shape_cast %18 : vector<8x256xf32> to vector<1x8x256xf32>
      %cst_13 = arith.constant dense<0.000000e+00> : vector<1xf32>
      %20 = vector.multi_reduction <add>, %19, %cst_13 [1, 2] : vector<1x8x256xf32> to vector<1xf32>
      %21 = vector.shape_cast %20 : vector<1xf32> to vector<1x1x1xf32>
      %22 = vector.extract %21[0, 0, 0] : f32 from vector<1x1x1xf32>
      %c0_14 = arith.constant 0 : index
      %c0_15 = arith.constant 0 : index
      %23 = memref.load %arg3[%c0_14, %c0_15] : memref<1x4xf32, #tpu.memory_space<smem>>
      memref.store %22, %arg3[%c0_14, %c0_15] : memref<1x4xf32, #tpu.memory_space<smem>>
      %c0_16 = arith.constant 0 : index
      %c0_17 = arith.constant 0 : index
      %24 = vector.load %arg5[%c0_16, %c0_17] : memref<8x256xf32, #tpu.memory_space<vmem>>, vector<8x256xf32>
      %25 = vector.shape_cast %24 : vector<8x256xf32> to vector<1x8x256xf32>
      %cst_18 = arith.constant dense<0.000000e+00> : vector<1xf32>
      %26 = vector.multi_reduction <add>, %25, %cst_18 [1, 2] : vector<1x8x256xf32> to vector<1xf32>
      %27 = vector.shape_cast %26 : vector<1xf32> to vector<1x1x1xf32>
      %28 = vector.extract %27[0, 0, 0] : f32 from vector<1x1x1xf32>
      %c0_19 = arith.constant 0 : index
      %c1 = arith.constant 1 : index
      %29 = memref.load %arg3[%c0_19, %c1] : memref<1x4xf32, #tpu.memory_space<smem>>
      memref.store %28, %arg3[%c0_19, %c1] : memref<1x4xf32, #tpu.memory_space<smem>>
      %c0_20 = arith.constant 0 : index
      %c0_21 = arith.constant 0 : index
      %30 = vector.load %arg6[%c0_20, %c0_21] : memref<8x256xf32, #tpu.memory_space<vmem>>, vector<8x256xf32>
      %31 = vector.shape_cast %30 : vector<8x256xf32> to vector<1x8x256xf32>
      %cst_22 = arith.constant dense<0.000000e+00> : vector<1xf32>
      %32 = vector.multi_reduction <add>, %31, %cst_22 [1, 2] : vector<1x8x256xf32> to vector<1xf32>
      %33 = vector.shape_cast %32 : vector<1xf32> to vector<1x1x1xf32>
      %34 = vector.extract %33[0, 0, 0] : f32 from vector<1x1x1xf32>
      %c0_23 = arith.constant 0 : index
      %c2 = arith.constant 2 : index
      %35 = memref.load %arg3[%c0_23, %c2] : memref<1x4xf32, #tpu.memory_space<smem>>
      memref.store %34, %arg3[%c0_23, %c2] : memref<1x4xf32, #tpu.memory_space<smem>>
      %c0_24 = arith.constant 0 : index
      %c0_25 = arith.constant 0 : index
      %36 = vector.load %arg7[%c0_24, %c0_25] : memref<8x256xf32, #tpu.memory_space<vmem>>, vector<8x256xf32>
      %37 = vector.shape_cast %36 : vector<8x256xf32> to vector<1x8x256xf32>
      %cst_26 = arith.constant dense<0.000000e+00> : vector<1xf32>
      %38 = vector.multi_reduction <add>, %37, %cst_26 [1, 2] : vector<1x8x256xf32> to vector<1xf32>
      %39 = vector.shape_cast %38 : vector<1xf32> to vector<1x1x1xf32>
      %40 = vector.extract %39[0, 0, 0] : f32 from vector<1x1x1xf32>
      %c0_27 = arith.constant 0 : index
      %c3 = arith.constant 3 : index
      %41 = memref.load %arg3[%c0_27, %c3] : memref<1x4xf32, #tpu.memory_space<smem>>
      memref.store %40, %arg3[%c0_27, %c3] : memref<1x4xf32, #tpu.memory_space<smem>>
    } else {
    }
    return
  }
  func.func @transform_0(%arg0: i32) -> (i32, i32) {
    %c0_i32 = arith.constant 0 : i32
    %c0_i32_0 = arith.constant 0 : i32
    return %arg0, %c0_i32 : i32, i32
  }
  func.func @transform_1(%arg0: i32) -> (i32, i32) {
    %c0_i32 = arith.constant 0 : i32
    %c0_i32_0 = arith.constant 0 : i32
    return %arg0, %c0_i32 : i32, i32
  }
  func.func @transform_2(%arg0: i32) -> (i32, i32) {
    %c0_i32 = arith.constant 0 : i32
    %c0_i32_0 = arith.constant 0 : i32
    %c0_i32_1 = arith.constant 0 : i32
    return %c0_i32, %c0_i32_0 : i32, i32
  }
}

</mosaic_0001>

<llo_original>
// kernel: tpu_custom_call.1
$region0: #{tpu_custom_call.1}
  #allocation0 [shape = 'u32[]', space=smem, size = 0x4, offset = 0x4, fixed_abs, tag = 'smem constant byte address 0x4 - core index']
  #allocation1 [shape = 'u32[144,128]{1,0:T(1,128)}', space=vmem, size = 0x12000, scoped, tag = 'internal scratch']
  #allocation2 [shape = 'f32[8,256]{1,0:T(8,128)}', space=vmem, size = 0x2000, scoped, tag = 'scratch operand']
  #allocation3 [shape = 'f32[8,256]{1,0:T(8,128)}', space=vmem, size = 0x2000, scoped, tag = 'scratch operand']
  #allocation4 [shape = 'f32[8,256]{1,0:T(8,128)}', space=vmem, size = 0x2000, scoped, tag = 'scratch operand']
  #allocation5 [shape = 'f32[8,256]{1,0:T(8,128)}', space=vmem, size = 0x2000, scoped, tag = 'scratch operand']
  %s0 = inlined_call_operand.hbm [shape: f32[200,256], index: 0, kind: input, shape index: {}]
  %s1 = inlined_call_operand.hbm [shape: f32[200,256], index: 1, kind: input, shape index: {}]
  %s2 = inlined_call_operand.hbm [shape: f32[1,4], index: 2, kind: output, shape index: {}]
  %s3 = sld [smem:[#allocation0]]
  $region42: #{tpu_custom_call.1} parent=0
    _
  %s5 = ssub.s32 1, %s3
  %s6 = scalar_select 0, %s5, %s3
  $region1: #{tpu_custom_call.1} parent=0
    #allocation6 [shape = 'u8[229376]{0}', space=vmem, size = 0x38000, scoped, tag = 'input window, operand 0, single buffered']
    #allocation7 [shape = 's32[1]{0}', space=sflag, size = 0x4, scoped, tag = 'scoped memory for tpu_custom_call.1']
    #allocation8 [shape = 's32[1]{0}', space=sflag, size = 0x4, scoped, tag = 'scoped memory for tpu_custom_call.1']
    #allocation9 [shape = 'u8[229376]{0}', space=vmem, size = 0x38000, scoped, tag = 'input window, operand 1, single buffered']
    #allocation10 [shape = 's32[1]{0}', space=sflag, size = 0x4, scoped, tag = 'scoped memory for tpu_custom_call.1']
    #allocation11 [shape = 'u8[512]{0}', space=smem, size = 0x200, scoped, tag = 'output window, operand 0, single buffered']
    %7 = vsyncpa [#allocation7], 0
    %8 = vsyncpa [#allocation10], 0
    %9 = vsyncpa [#allocation8], 0
    // Predicated region
    $region2: #{tpu_custom_call.1} parent=1 // pred_check
      _
    $region3: #{tpu_custom_call.1} parent=1 // pred_check_branch
      %11 = sbr.rel (0) target = $region5
    $region4: #{tpu_custom_call.1} parent=1 // pred_region
      %s13 = ssub.s32 7168, 6400
      %14 = vsyncadd [#allocation7], %s13
      %s15 = sshll.u32 [#allocation6], 4
      %s16 = int_to_ptr.vmem [resolvable:$true] %s15
      %21 = dma.hbm_to_vmem [thread:$0]  %s0, 6400, %s16, [#allocation7], 256, 256, 16
    $region5: #{tpu_custom_call.1} parent=1 // pred_fallthru
      _
    // Predicated region
    $region6: #{tpu_custom_call.1} parent=1 // pred_check
      _
    $region7: #{tpu_custom_call.1} parent=1 // pred_check_branch
      %23 = sbr.rel (0) target = $region9
    $region8: #{tpu_custom_call.1} parent=1 // pred_region
      %s25 = ssub.s32 7168, 6400
      %26 = vsyncadd [#allocation10], %s25
      %s27 = sshll.u32 [#allocation9], 4
      %s28 = int_to_ptr.vmem [resolvable:$true] %s27
      %33 = dma.hbm_to_vmem [thread:$0]  %s1, 6400, %s28, [#allocation10], 256, 256, 16
    $region9: #{tpu_custom_call.1} parent=1 // pred_fallthru
      _
    // Predicated region
    $region10: #{tpu_custom_call.1} parent=1 // pred_check
      _
    $region11: #{tpu_custom_call.1} parent=1 // pred_check_branch
      %35 = sbr.rel (0) target = $region13
    $region12: #{tpu_custom_call.1} parent=1 // pred_region
      %36 = dma.done [#allocation7], 7168
    $region13: #{tpu_custom_call.1} parent=1 // pred_fallthru
      _
    // Predicated region
    $region14: #{tpu_custom_call.1} parent=1 // pred_check
      _
    $region15: #{tpu_custom_call.1} parent=1 // pred_check_branch
      %38 = sbr.rel (0) target = $region17
    $region16: #{tpu_custom_call.1} parent=1 // pred_region
      %39 = dma.done [#allocation10], 7168
    $region17: #{tpu_custom_call.1} parent=1 // pred_fallthru
      _
    %p40 = scmp.eq.s32.totalorder 0, 0
    // Predicated region
    $region18: #{tpu_custom_call.1} parent=1 // pred_check
      %p41 = pneg %p40
    $region19: #{tpu_custom_call.1} parent=1 // pred_check_branch
      %43 = sbr.rel (%p41) target = $region21
    $region20: #{tpu_custom_call.1} parent=1 // pred_region
      %44 = vst [vmem:[#allocation2] sm:$0xff] 0.0
      %45 = vst [vmem:[#allocation2 + $0x8] sm:$0xff] 0.0
      %46 = vst [vmem:[#allocation3] sm:$0xff] 0.0
      %47 = vst [vmem:[#allocation3 + $0x8] sm:$0xff] 0.0
      %48 = vst [vmem:[#allocation4] sm:$0xff] 0.0
      %49 = vst [vmem:[#allocation4 + $0x8] sm:$0xff] 0.0
      %50 = vst [vmem:[#allocation5] sm:$0xff] 0.0
      %51 = vst [vmem:[#allocation5 + $0x8] sm:$0xff] 0.0
    $region21: #{tpu_custom_call.1} parent=1 // pred_fallthru
      _
    %v52 = vld [vmem:[#allocation6] sm:$0xff]
    %v53 = vld [vmem:[#allocation6 + $0x8] sm:$0xff]
    %v54 = vld [vmem:[#allocation6 + $0x10] sm:$0xff]
    %v55 = vld [vmem:[#allocation6 + $0x18] sm:$0xff]
    %v56 = vld [vmem:[#allocation6 + $0x20] sm:$0xff]
    %v57 = vld [vmem:[#allocation6 + $0x28] sm:$0xff]
    %v58 = vld [vmem:[#allocation6 + $0x30] sm:$0xff]
    %v59 = vld [vmem:[#allocation6 + $0x38] sm:$0xff]
    %v60 = vld [vmem:[#allocation6 + $0x40] sm:$0xff]
    %v61 = vld [vmem:[#allocation6 + $0x48] sm:$0xff]
    %v62 = vld [vmem:[#allocation6 + $0x50] sm:$0xff]
    %v63 = vld [vmem:[#allocation6 + $0x58] sm:$0xff]
    %v64 = vld [vmem:[#allocation6 + $0x60] sm:$0xff]
    %v65 = vld [vmem:[#allocation6 + $0x68] sm:$0xff]
    %v66 = vld [vmem:[#allocation6 + $0x70] sm:$0xff]
    %v67 = vld [vmem:[#allocation6 + $0x78] sm:$0xff]
    %v68 = vld [vmem:[#allocation6 + $0x80] sm:$0xff]
    %v69 = vld [vmem:[#allocation6 + $0x88] sm:$0xff]
    %v70 = vld [vmem:[#allocation6 + $0x90] sm:$0xff]
    %v71 = vld [vmem:[#allocation6 + $0x98] sm:$0xff]
    %v72 = vld [vmem:[#allocation6 + $0xa0] sm:$0xff]
    %v73 = vld [vmem:[#allocation6 + $0xa8] sm:$0xff]
    %v74 = vld [vmem:[#allocation6 + $0xb0] sm:$0xff]
    %v75 = vld [vmem:[#allocation6 + $0xb8] sm:$0xff]
    %v76 = vld [vmem:[#allocation6 + $0xc0] sm:$0xff]
    %v77 = vld [vmem:[#allocation6 + $0xc8] sm:$0xff]
    %v78 = vld [vmem:[#allocation6 + $0xd0] sm:$0xff]
    %v79 = vld [vmem:[#allocation6 + $0xd8] sm:$0xff]
    %v80 = vld [vmem:[#allocation6 + $0xe0] sm:$0xff]
    %v81 = vld [vmem:[#allocation6 + $0xe8] sm:$0xff]
    %v82 = vld [vmem:[#allocation6 + $0xf0] sm:$0xff]
    %v83 = vld [vmem:[#allocation6 + $0xf8] sm:$0xff]
    %v84 = vld [vmem:[#allocation6 + $0x100] sm:$0xff]
    %v85 = vld [vmem:[#allocation6 + $0x108] sm:$0xff]
    %v86 = vld [vmem:[#allocation6 + $0x110] sm:$0xff]
    %v87 = vld [vmem:[#allocation6 + $0x118] sm:$0xff]
    %v88 = vld [vmem:[#allocation6 + $0x120] sm:$0xff]
    %v89 = vld [vmem:[#allocation6 + $0x128] sm:$0xff]
    %v90 = vld [vmem:[#allocation6 + $0x130] sm:$0xff]
    %v91 = vld [vmem:[#allocation6 + $0x138] sm:$0xff]
    %v92 = vld [vmem:[#allocation6 + $0x140] sm:$0xff]
    %v93 = vld [vmem:[#allocation6 + $0x148] sm:$0xff]
    %v94 = vld [vmem:[#allocation6 + $0x150] sm:$0xff]
    %v95 = vld [vmem:[#allocation6 + $0x158] sm:$0xff]
    %v96 = vld [vmem:[#allocation6 + $0x160] sm:$0xff]
    %v97 = vld [vmem:[#allocation6 + $0x168] sm:$0xff]
    %v98 = vld [vmem:[#allocation6 + $0x170] sm:$0xff]
    %v99 = vld [vmem:[#allocation6 + $0x178] sm:$0xff]
    %v100 = vld [vmem:[#allocation6 + $0x180] sm:$0xff]
    %v101 = vld [vmem:[#allocation6 + $0x188] sm:$0xff]
    %v102 = vld [vmem:[#allocation6 + $0x190] sm:$0xff]
    %v103 = vld [vmem:[#allocation6 + $0x198] sm:$0xff]
    %v104 = vld [vmem:[#allocation6 + $0x1a0] sm:$0xff]
    %v105 = vld [vmem:[#allocation6 + $0x1a8] sm:$0xff]
    %v106 = vld [vmem:[#allocation6 + $0x1b0] sm:$0xff]
    %v107 = vld [vmem:[#allocation6 + $0x1b8] sm:$0xff]
    %v108 = vld [vmem:[#allocation9] sm:$0xff]
    %v109 = vld [vmem:[#allocation9 + $0x8] sm:$0xff]
    %v110 = vld [vmem:[#allocation9 + $0x10] sm:$0xff]
    %v111 = vld [vmem:[#allocation9 + $0x18] sm:$0xff]
    %v112 = vld [vmem:[#allocation9 + $0x20] sm:$0xff]
    %v113 = vld [vmem:[#allocation9 + $0x28] sm:$0xff]
    %v114 = vld [vmem:[#allocation9 + $0x30] sm:$0xff]
    %v115 = vld [vmem:[#allocation9 + $0x38] sm:$0xff]
    %v116 = vld [vmem:[#allocation9 + $0x40] sm:$0xff]
    %v117 = vld [vmem:[#allocation9 + $0x48] sm:$0xff]
    %v118 = vld [vmem:[#allocation9 + $0x50] sm:$0xff]
    %v119 = vld [vmem:[#allocation9 + $0x58] sm:$0xff]
    %v120 = vld [vmem:[#allocation9 + $0x60] sm:$0xff]
    %v121 = vld [vmem:[#allocation9 + $0x68] sm:$0xff]
    %v122 = vld [vmem:[#allocation9 + $0x70] sm:$0xff]
    %v123 = vld [vmem:[#allocation9 + $0x78] sm:$0xff]
    %v124 = vld [vmem:[#allocation9 + $0x80] sm:$0xff]
    %v125 = vld [vmem:[#allocation9 + $0x88] sm:$0xff]
    %v126 = vld [vmem:[#allocation9 + $0x90] sm:$0xff]
    %v127 = vld [vmem:[#allocation9 + $0x98] sm:$0xff]
    %v128 = vld [vmem:[#allocation9 + $0xa0] sm:$0xff]
    %v129 = vld [vmem:[#allocation9 + $0xa8] sm:$0xff]
    %v130 = vld [vmem:[#allocation9 + $0xb0] sm:$0xff]
    %v131 = vld [vmem:[#allocation9 + $0xb8] sm:$0xff]
    %v132 = vld [vmem:[#allocation9 + $0xc0] sm:$0xff]
    %v133 = vld [vmem:[#allocation9 + $0xc8] sm:$0xff]
    %v134 = vld [vmem:[#allocation9 + $0xd0] sm:$0xff]
    %v135 = vld [vmem:[#allocation9 + $0xd8] sm:$0xff]
    %v136 = vld [vmem:[#allocation9 + $0xe0] sm:$0xff]
    %v137 = vld [vmem:[#allocation9 + $0xe8] sm:$0xff]
    %v138 = vld [vmem:[#allocation9 + $0xf0] sm:$0xff]
    %v139 = vld [vmem:[#allocation9 + $0xf8] sm:$0xff]
    %v140 = vld [vmem:[#allocation9 + $0x100] sm:$0xff]
    %v141 = vld [vmem:[#allocation9 + $0x108] sm:$0xff]
    %v142 = vld [vmem:[#allocation9 + $0x110] sm:$0xff]
    %v143 = vld [vmem:[#allocation9 + $0x118] sm:$0xff]
    %v144 = vld [vmem:[#allocation9 + $0x120] sm:$0xff]
    %v145 = vld [vmem:[#allocation9 + $0x128] sm:$0xff]
    %v146 = vld [vmem:[#allocation9 + $0x130] sm:$0xff]
    %v147 = vld [vmem:[#allocation9 + $0x138] sm:$0xff]
    %v148 = vld [vmem:[#allocation9 + $0x140] sm:$0xff]
    %v149 = vld [vmem:[#allocation9 + $0x148] sm:$0xff]
    %v150 = vld [vmem:[#allocation9 + $0x150] sm:$0xff]
    %v151 = vld [vmem:[#allocation9 + $0x158] sm:$0xff]
    %v152 = vld [vmem:[#allocation9 + $0x160] sm:$0xff]
    %v153 = vld [vmem:[#allocation9 + $0x168] sm:$0xff]
    %v154 = vld [vmem:[#allocation9 + $0x170] sm:$0xff]
    %v155 = vld [vmem:[#allocation9 + $0x178] sm:$0xff]
    %v156 = vld [vmem:[#allocation9 + $0x180] sm:$0xff]
    %v157 = vld [vmem:[#allocation9 + $0x188] sm:$0xff]
    %v158 = vld [vmem:[#allocation9 + $0x190] sm:$0xff]
    %v159 = vld [vmem:[#allocation9 + $0x198] sm:$0xff]
    %v160 = vld [vmem:[#allocation9 + $0x1a0] sm:$0xff]
    %v161 = vld [vmem:[#allocation9 + $0x1a8] sm:$0xff]
    %v162 = vld [vmem:[#allocation9 + $0x1b0] sm:$0xff]
    %v163 = vld [vmem:[#allocation9 + $0x1b8] sm:$0xff]
    %vm164 = vcmp.gt.f32.partialorder %v108, 0.0
    %vm165 = vcmp.gt.f32.partialorder %v109, 0.0
    %vm166 = vcmp.gt.f32.partialorder %v110, 0.0
    %vm167 = vcmp.gt.f32.partialorder %v111, 0.0
    %vm168 = vcmp.gt.f32.partialorder %v112, 0.0
    %vm169 = vcmp.gt.f32.partialorder %v113, 0.0
    %vm170 = vcmp.gt.f32.partialorder %v114, 0.0
    %vm171 = vcmp.gt.f32.partialorder %v115, 0.0
    %vm172 = vcmp.gt.f32.partialorder %v116, 0.0
    %vm173 = vcmp.gt.f32.partialorder %v117, 0.0
    %vm174 = vcmp.gt.f32.partialorder %v118, 0.0
    %vm175 = vcmp.gt.f32.partialorder %v119, 0.0
    %vm176 = vcmp.gt.f32.partialorder %v120, 0.0
    %vm177 = vcmp.gt.f32.partialorder %v121, 0.0
    %vm178 = vcmp.gt.f32.partialorder %v122, 0.0
    %vm179 = vcmp.gt.f32.partialorder %v123, 0.0
    %vm180 = vcmp.gt.f32.partialorder %v124, 0.0
    %vm181 = vcmp.gt.f32.partialorder %v125, 0.0
    %vm182 = vcmp.gt.f32.partialorder %v126, 0.0
    %vm183 = vcmp.gt.f32.partialorder %v127, 0.0
    %vm184 = vcmp.gt.f32.partialorder %v128, 0.0
    %vm185 = vcmp.gt.f32.partialorder %v129, 0.0
    %vm186 = vcmp.gt.f32.partialorder %v130, 0.0
    %vm187 = vcmp.gt.f32.partialorder %v131, 0.0
    %vm188 = vcmp.gt.f32.partialorder %v132, 0.0
    %vm189 = vcmp.gt.f32.partialorder %v133, 0.0
    %vm190 = vcmp.gt.f32.partialorder %v134, 0.0
    %vm191 = vcmp.gt.f32.partialorder %v135, 0.0
    %vm192 = vcmp.gt.f32.partialorder %v136, 0.0
    %vm193 = vcmp.gt.f32.partialorder %v137, 0.0
    %vm194 = vcmp.gt.f32.partialorder %v138, 0.0
    %vm195 = vcmp.gt.f32.partialorder %v139, 0.0
    %vm196 = vcmp.gt.f32.partialorder %v140, 0.0
    %vm197 = vcmp.gt.f32.partialorder %v141, 0.0
    %vm198 = vcmp.gt.f32.partialorder %v142, 0.0
    %vm199 = vcmp.gt.f32.partialorder %v143, 0.0
    %vm200 = vcmp.gt.f32.partialorder %v144, 0.0
    %vm201 = vcmp.gt.f32.partialorder %v145, 0.0
    %vm202 = vcmp.gt.f32.partialorder %v146, 0.0
    %vm203 = vcmp.gt.f32.partialorder %v147, 0.0
    %vm204 = vcmp.gt.f32.partialorder %v148, 0.0
    %vm205 = vcmp.gt.f32.partialorder %v149, 0.0
    %vm206 = vcmp.gt.f32.partialorder %v150, 0.0
    %vm207 = vcmp.gt.f32.partialorder %v151, 0.0
    %vm208 = vcmp.gt.f32.partialorder %v152, 0.0
    %vm209 = vcmp.gt.f32.partialorder %v153, 0.0
    %vm210 = vcmp.gt.f32.partialorder %v154, 0.0
    %vm211 = vcmp.gt.f32.partialorder %v155, 0.0
    %vm212 = vcmp.gt.f32.partialorder %v156, 0.0
    %vm213 = vcmp.gt.f32.partialorder %v157, 0.0
    %vm214 = vcmp.gt.f32.partialorder %v158, 0.0
    %vm215 = vcmp.gt.f32.partialorder %v159, 0.0
    %vm216 = vcmp.gt.f32.partialorder %v160, 0.0
    %vm217 = vcmp.gt.f32.partialorder %v161, 0.0
    %vm218 = vcmp.gt.f32.partialorder %v162, 0.0
    %vm219 = vcmp.gt.f32.partialorder %v163, 0.0
    %vm220 = vcmp.eq.f32.partialorder %v108, 0.0
    %vm221 = vcmp.eq.f32.partialorder %v109, 0.0
    %vm222 = vcmp.eq.f32.partialorder %v110, 0.0
    %vm223 = vcmp.eq.f32.partialorder %v111, 0.0
    %vm224 = vcmp.eq.f32.partialorder %v112, 0.0
    %vm225 = vcmp.eq.f32.partialorder %v113, 0.0
    %vm226 = vcmp.eq.f32.partialorder %v114, 0.0
    %vm227 = vcmp.eq.f32.partialorder %v115, 0.0
    %vm228 = vcmp.eq.f32.partialorder %v116, 0.0
    %vm229 = vcmp.eq.f32.partialorder %v117, 0.0
    %vm230 = vcmp.eq.f32.partialorder %v118, 0.0
    %vm231 = vcmp.eq.f32.partialorder %v119, 0.0
    %vm232 = vcmp.eq.f32.partialorder %v120, 0.0
    %vm233 = vcmp.eq.f32.partialorder %v121, 0.0
    %vm234 = vcmp.eq.f32.partialorder %v122, 0.0
    %vm235 = vcmp.eq.f32.partialorder %v123, 0.0
    %vm236 = vcmp.eq.f32.partialorder %v124, 0.0
    %vm237 = vcmp.eq.f32.partialorder %v125, 0.0
    %vm238 = vcmp.eq.f32.partialorder %v126, 0.0
    %vm239 = vcmp.eq.f32.partialorder %v127, 0.0
    %vm240 = vcmp.eq.f32.partialorder %v128, 0.0
    %vm241 = vcmp.eq.f32.partialorder %v129, 0.0
    %vm242 = vcmp.eq.f32.partialorder %v130, 0.0
    %vm243 = vcmp.eq.f32.partialorder %v131, 0.0
    %vm244 = vcmp.eq.f32.partialorder %v132, 0.0
    %vm245 = vcmp.eq.f32.partialorder %v133, 0.0
    %vm246 = vcmp.eq.f32.partialorder %v134, 0.0
    %vm247 = vcmp.eq.f32.partialorder %v135, 0.0
    %vm248 = vcmp.eq.f32.partialorder %v136, 0.0
    %vm249 = vcmp.eq.f32.partialorder %v137, 0.0
    %vm250 = vcmp.eq.f32.partialorder %v138, 0.0
    %vm251 = vcmp.eq.f32.partialorder %v139, 0.0
    %vm252 = vcmp.eq.f32.partialorder %v140, 0.0
    %vm253 = vcmp.eq.f32.partialorder %v141, 0.0
    %vm254 = vcmp.eq.f32.partialorder %v142, 0.0
    %vm255 = vcmp.eq.f32.partialorder %v143, 0.0
    %vm256 = vcmp.eq.f32.partialorder %v144, 0.0
    %vm257 = vcmp.eq.f32.partialorder %v145, 0.0
    %vm258 = vcmp.eq.f32.partialorder %v146, 0.0
    %vm259 = vcmp.eq.f32.partialorder %v147, 0.0
    %vm260 = vcmp.eq.f32.partialorder %v148, 0.0
    %vm261 = vcmp.eq.f32.partialorder %v149, 0.0
    %vm262 = vcmp.eq.f32.partialorder %v150, 0.0
    %vm263 = vcmp.eq.f32.partialorder %v151, 0.0
    %vm264 = vcmp.eq.f32.partialorder %v152, 0.0
    %vm265 = vcmp.eq.f32.partialorder %v153, 0.0
    %vm266 = vcmp.eq.f32.partialorder %v154, 0.0
    %vm267 = vcmp.eq.f32.partialorder %v155, 0.0
    %vm268 = vcmp.eq.f32.partialorder %v156, 0.0
    %vm269 = vcmp.eq.f32.partialorder %v157, 0.0
    %vm270 = vcmp.eq.f32.partialorder %v158, 0.0
    %vm271 = vcmp.eq.f32.partialorder %v159, 0.0
    %vm272 = vcmp.eq.f32.partialorder %v160, 0.0
    %vm273 = vcmp.eq.f32.partialorder %v161, 0.0
    %vm274 = vcmp.eq.f32.partialorder %v162, 0.0
    %vm275 = vcmp.eq.f32.partialorder %v163, 0.0
    // Predicated region
    $region22: #{tpu_custom_call.1} parent=1 // pred_check
      %p276 = pneg %p40
    $region23: #{tpu_custom_call.1} parent=1 // pred_check_branch
      %278 = sbr.rel (%p276) target = $region25
    $region24: #{tpu_custom_call.1} parent=1 // pred_region
      %s279 = smul.u32 0, 224
      %v280 = vlaneseq
      %v281 = vshrl.u32 %v280, 7
      %v282 = vadd.s32 %v281, 8
      %v283 = vadd.s32 %v281, 16
      %v284 = vadd.s32 %v281, 24
      %v285 = vadd.s32 %v281, 32
      %v286 = vadd.s32 %v281, 40
      %v287 = vadd.s32 %v281, 48
      %v288 = vadd.s32 %v281, 56
      %v289 = vadd.s32 %v281, 64
      %v290 = vadd.s32 %v281, 72
      %v291 = vadd.s32 %v281, 80
      %v292 = vadd.s32 %v281, 88
      %v293 = vadd.s32 %v281, 96
      %v294 = vadd.s32 %v281, 104
      %v295 = vadd.s32 %v281, 112
      %v296 = vadd.s32 %v281, 120
      %v297 = vadd.s32 %v281, 128
      %v298 = vadd.s32 %v281, 136
      %v299 = vadd.s32 %v281, 144
      %v300 = vadd.s32 %v281, 152
      %v301 = vadd.s32 %v281, 160
      %v302 = vadd.s32 %v281, 168
      %v303 = vadd.s32 %v281, 176
      %v304 = vadd.s32 %v281, 184
      %v305 = vadd.s32 %v281, 192
      %v306 = vadd.s32 %v281, 200
      %v307 = vadd.s32 %v281, 208
      %v308 = vadd.s32 %v281, 216
      %v309 = vstv %s279
      %v310 = vadd.s32 %v309, %v281
      %v311 = vadd.s32 %v309, %v282
      %v312 = vadd.s32 %v309, %v283
      %v313 = vadd.s32 %v309, %v284
      %v314 = vadd.s32 %v309, %v285
      %v315 = vadd.s32 %v309, %v286
      %v316 = vadd.s32 %v309, %v287
      %v317 = vadd.s32 %v309, %v288
      %v318 = vadd.s32 %v309, %v289
      %v319 = vadd.s32 %v309, %v290
      %v320 = vadd.s32 %v309, %v291
      %v321 = vadd.s32 %v309, %v292
      %v322 = vadd.s32 %v309, %v293
      %v323 = vadd.s32 %v309, %v294
      %v324 = vadd.s32 %v309, %v295
      %v325 = vadd.s32 %v309, %v296
      %v326 = vadd.s32 %v309, %v297
      %v327 = vadd.s32 %v309, %v298
      %v328 = vadd.s32 %v309, %v299
      %v329 = vadd.s32 %v309, %v300
      %v330 = vadd.s32 %v309, %v301
      %v331 = vadd.s32 %v309, %v302
      %v332 = vadd.s32 %v309, %v303
      %v333 = vadd.s32 %v309, %v304
      %v334 = vadd.s32 %v309, %v305
      %v335 = vadd.s32 %v309, %v306
      %v336 = vadd.s32 %v309, %v307
      %v337 = vadd.s32 %v309, %v308
      %vm338 = vcmp.lt.s32.totalorder %v310, 200
      %vm339 = vcmp.lt.s32.totalorder %v311, 200
      %vm340 = vcmp.lt.s32.totalorder %v312, 200
      %vm341 = vcmp.lt.s32.totalorder %v313, 200
      %vm342 = vcmp.lt.s32.totalorder %v314, 200
      %vm343 = vcmp.lt.s32.totalorder %v315, 200
      %vm344 = vcmp.lt.s32.totalorder %v316, 200
      %vm345 = vcmp.lt.s32.totalorder %v317, 200
      %vm346 = vcmp.lt.s32.totalorder %v318, 200
      %vm347 = vcmp.lt.s32.totalorder %v319, 200
      %vm348 = vcmp.lt.s32.totalorder %v320, 200
      %vm349 = vcmp.lt.s32.totalorder %v321, 200
      %vm350 = vcmp.lt.s32.totalorder %v322, 200
      %vm351 = vcmp.lt.s32.totalorder %v323, 200
      %vm352 = vcmp.lt.s32.totalorder %v324, 200
      %vm353 = vcmp.lt.s32.totalorder %v325, 200
      %vm354 = vcmp.lt.s32.totalorder %v326, 200
      %vm355 = vcmp.lt.s32.totalorder %v327, 200
      %vm356 = vcmp.lt.s32.totalorder %v328, 200
      %vm357 = vcmp.lt.s32.totalorder %v329, 200
      %vm358 = vcmp.lt.s32.totalorder %v330, 200
      %vm359 = vcmp.lt.s32.totalorder %v331, 200
      %vm360 = vcmp.lt.s32.totalorder %v332, 200
      %vm361 = vcmp.lt.s32.totalorder %v333, 200
      %vm362 = vcmp.lt.s32.totalorder %v334, 200
      %vm363 = vcmp.lt.s32.totalorder %v335, 200
      %vm364 = vcmp.lt.s32.totalorder %v336, 200
      %vm365 = vcmp.lt.s32.totalorder %v337, 200
      %v366 = vsel %vm338, 1, 0
      %v367 = vsel %vm339, 1, 0
      %v368 = vsel %vm340, 1, 0
      %v369 = vsel %vm341, 1, 0
      %v370 = vsel %vm342, 1, 0
      %v371 = vsel %vm343, 1, 0
      %v372 = vsel %vm344, 1, 0
      %v373 = vsel %vm345, 1, 0
      %v374 = vsel %vm346, 1, 0
      %v375 = vsel %vm347, 1, 0
      %v376 = vsel %vm348, 1, 0
      %v377 = vsel %vm349, 1, 0
      %v378 = vsel %vm350, 1, 0
      %v379 = vsel %vm351, 1, 0
      %v380 = vsel %vm352, 1, 0
      %v381 = vsel %vm353, 1, 0
      %v382 = vsel %vm354, 1, 0
      %v383 = vsel %vm355, 1, 0
      %v384 = vsel %vm356, 1, 0
      %v385 = vsel %vm357, 1, 0
      %v386 = vsel %vm358, 1, 0
      %v387 = vsel %vm359, 1, 0
      %v388 = vsel %vm360, 1, 0
      %v389 = vsel %vm361, 1, 0
      %v390 = vsel %vm362, 1, 0
      %v391 = vsel %vm363, 1, 0
      %v392 = vsel %vm364, 1, 0
      %v393 = vsel %vm365, 1, 0
      %vm394 = vcmp.eq.s32.totalorder %v366, 1
      %vm395 = vcmp.eq.s32.totalorder %v367, 1
      %vm396 = vcmp.eq.s32.totalorder %v368, 1
      %vm397 = vcmp.eq.s32.totalorder %v369, 1
      %vm398 = vcmp.eq.s32.totalorder %v370, 1
      %vm399 = vcmp.eq.s32.totalorder %v371, 1
      %vm400 = vcmp.eq.s32.totalorder %v372, 1
      %vm401 = vcmp.eq.s32.totalorder %v373, 1
      %vm402 = vcmp.eq.s32.totalorder %v374, 1
      %vm403 = vcmp.eq.s32.totalorder %v375, 1
      %vm404 = vcmp.eq.s32.totalorder %v376, 1
      %vm405 = vcmp.eq.s32.totalorder %v377, 1
      %vm406 = vcmp.eq.s32.totalorder %v378, 1
      %vm407 = vcmp.eq.s32.totalorder %v379, 1
      %vm408 = vcmp.eq.s32.totalorder %v380, 1
      %vm409 = vcmp.eq.s32.totalorder %v381, 1
      %vm410 = vcmp.eq.s32.totalorder %v382, 1
      %vm411 = vcmp.eq.s32.totalorder %v383, 1
      %vm412 = vcmp.eq.s32.totalorder %v384, 1
      %vm413 = vcmp.eq.s32.totalorder %v385, 1
      %vm414 = vcmp.eq.s32.totalorder %v386, 1
      %vm415 = vcmp.eq.s32.totalorder %v387, 1
      %vm416 = vcmp.eq.s32.totalorder %v388, 1
      %vm417 = vcmp.eq.s32.totalorder %v389, 1
      %vm418 = vcmp.eq.s32.totalorder %v390, 1
      %vm419 = vcmp.eq.s32.totalorder %v391, 1
      %vm420 = vcmp.eq.s32.totalorder %v392, 1
      %vm421 = vcmp.eq.s32.totalorder %v393, 1
      %vm422 = vmand %vm164, %vm394
      %vm423 = vmand %vm165, %vm394
      %vm424 = vmand %vm166, %vm395
      %vm425 = vmand %vm167, %vm395
      %vm426 = vmand %vm168, %vm396
      %vm427 = vmand %vm169, %vm396
      %vm428 = vmand %vm170, %vm397
      %vm429 = vmand %vm171, %vm397
      %vm430 = vmand %vm172, %vm398
      %vm431 = vmand %vm173, %vm398
      %vm432 = vmand %vm174, %vm399
      %vm433 = vmand %vm175, %vm399
      %vm434 = vmand %vm176, %vm400
      %vm435 = vmand %vm177, %vm400
      %vm436 = vmand %vm178, %vm401
      %vm437 = vmand %vm179, %vm401
      %vm438 = vmand %vm180, %vm402
      %vm439 = vmand %vm181, %vm402
      %vm440 = vmand %vm182, %vm403
      %vm441 = vmand %vm183, %vm403
      %vm442 = vmand %vm184, %vm404
      %vm443 = vmand %vm185, %vm404
      %vm444 = vmand %vm186, %vm405
      %vm445 = vmand %vm187, %vm405
      %vm446 = vmand %vm188, %vm406
      %vm447 = vmand %vm189, %vm406
      %vm448 = vmand %vm190, %vm407
      %vm449 = vmand %vm191, %vm407
      %vm450 = vmand %vm192, %vm408
      %vm451 = vmand %vm193, %vm408
      %vm452 = vmand %vm194, %vm409
      %vm453 = vmand %vm195, %vm409
      %vm454 = vmand %vm196, %vm410
      %vm455 = vmand %vm197, %vm410
      %vm456 = vmand %vm198, %vm411
      %vm457 = vmand %vm199, %vm411
      %vm458 = vmand %vm200, %vm412
      %vm459 = vmand %vm201, %vm412
      %vm460 = vmand %vm202, %vm413
      %vm461 = vmand %vm203, %vm413
      %vm462 = vmand %vm204, %vm414
      %vm463 = vmand %vm205, %vm414
      %vm464 = vmand %vm206, %vm415
      %vm465 = vmand %vm207, %vm415
      %vm466 = vmand %vm208, %vm416
      %vm467 = vmand %vm209, %vm416
      %vm468 = vmand %vm210, %vm417
      %vm469 = vmand %vm211, %vm417
      %vm470 = vmand %vm212, %vm418
      %vm471 = vmand %vm213, %vm418
      %vm472 = vmand %vm214, %vm419
      %vm473 = vmand %vm215, %vm419
      %vm474 = vmand %vm216, %vm420
      %vm475 = vmand %vm217, %vm420
      %vm476 = vmand %vm218, %vm421
      %vm477 = vmand %vm219, %vm421
      %vm478 = vmand %vm220, %vm394
      %vm479 = vmand %vm221, %vm394
      %vm480 = vmand %vm222, %vm395
      %vm481 = vmand %vm223, %vm395
      %vm482 = vmand %vm224, %vm396
      %vm483 = vmand %vm225, %vm396
      %vm484 = vmand %vm226, %vm397
      %vm485 = vmand %vm227, %vm397
      %vm486 = vmand %vm228, %vm398
      %vm487 = vmand %vm229, %vm398
      %vm488 = vmand %vm230, %vm399
      %vm489 = vmand %vm231, %vm399
      %vm490 = vmand %vm232, %vm400
      %vm491 = vmand %vm233, %vm400
      %vm492 = vmand %vm234, %vm401
      %vm493 = vmand %vm235, %vm401
      %vm494 = vmand %vm236, %vm402
      %vm495 = vmand %vm237, %vm402
      %vm496 = vmand %vm238, %vm403
      %vm497 = vmand %vm239, %vm403
      %vm498 = vmand %vm240, %vm404
      %vm499 = vmand %vm241, %vm404
      %vm500 = vmand %vm242, %vm405
      %vm501 = vmand %vm243, %vm405
      %vm502 = vmand %vm244, %vm406
      %vm503 = vmand %vm245, %vm406
      %vm504 = vmand %vm246, %vm407
      %vm505 = vmand %vm247, %vm407
      %vm506 = vmand %vm248, %vm408
      %vm507 = vmand %vm249, %vm408
      %vm508 = vmand %vm250, %vm409
      %vm509 = vmand %vm251, %vm409
      %vm510 = vmand %vm252, %vm410
      %vm511 = vmand %vm253, %vm410
      %vm512 = vmand %vm254, %vm411
      %vm513 = vmand %vm255, %vm411
      %vm514 = vmand %vm256, %vm412
      %vm515 = vmand %vm257, %vm412
      %vm516 = vmand %vm258, %vm413
      %vm517 = vmand %vm259, %vm413
      %vm518 = vmand %vm260, %vm414
      %vm519 = vmand %vm261, %vm414
      %vm520 = vmand %vm262, %vm415
      %vm521 = vmand %vm263, %vm415
      %vm522 = vmand %vm264, %vm416
      %vm523 = vmand %vm265, %vm416
      %vm524 = vmand %vm266, %vm417
      %vm525 = vmand %vm267, %vm417
      %vm526 = vmand %vm268, %vm418
      %vm527 = vmand %vm269, %vm418
      %vm528 = vmand %vm270, %vm419
      %vm529 = vmand %vm271, %vm419
      %vm530 = vmand %vm272, %vm420
      %vm531 = vmand %vm273, %vm420
      %vm532 = vmand %vm274, %vm421
      %vm533 = vmand %vm275, %vm421
      %v534 = vld [vmem:[#allocation2] sm:$0xff]
      %v535 = vld [vmem:[#allocation2 + $0x8] sm:$0xff]
      %v536 = vsel %vm422, %v52, 0.0
      %v537 = vsel %vm423, %v53, 0.0
      %v538 = vsel %vm424, %v54, 0.0
      %v539 = vsel %vm425, %v55, 0.0
      %v540 = vsel %vm426, %v56, 0.0
      %v541 = vsel %vm427, %v57, 0.0
      %v542 = vsel %vm428, %v58, 0.0
      %v543 = vsel %vm429, %v59, 0.0
      %v544 = vsel %vm430, %v60, 0.0
      %v545 = vsel %vm431, %v61, 0.0
      %v546 = vsel %vm432, %v62, 0.0
      %v547 = vsel %vm433, %v63, 0.0
      %v548 = vsel %vm434, %v64, 0.0
      %v549 = vsel %vm435, %v65, 0.0
      %v550 = vsel %vm436, %v66, 0.0
      %v551 = vsel %vm437, %v67, 0.0
      %v552 = vsel %vm438, %v68, 0.0
      %v553 = vsel %vm439, %v69, 0.0
      %v554 = vsel %vm440, %v70, 0.0
      %v555 = vsel %vm441, %v71, 0.0
      %v556 = vsel %vm442, %v72, 0.0
      %v557 = vsel %vm443, %v73, 0.0
      %v558 = vsel %vm444, %v74, 0.0
      %v559 = vsel %vm445, %v75, 0.0
      %v560 = vsel %vm446, %v76, 0.0
      %v561 = vsel %vm447, %v77, 0.0
      %v562 = vsel %vm448, %v78, 0.0
      %v563 = vsel %vm449, %v79, 0.0
      %v564 = vsel %vm450, %v80, 0.0
      %v565 = vsel %vm451, %v81, 0.0
      %v566 = vsel %vm452, %v82, 0.0
      %v567 = vsel %vm453, %v83, 0.0
      %v568 = vsel %vm454, %v84, 0.0
      %v569 = vsel %vm455, %v85, 0.0
      %v570 = vsel %vm456, %v86, 0.0
      %v571 = vsel %vm457, %v87, 0.0
      %v572 = vsel %vm458, %v88, 0.0
      %v573 = vsel %vm459, %v89, 0.0
      %v574 = vsel %vm460, %v90, 0.0
      %v575 = vsel %vm461, %v91, 0.0
      %v576 = vsel %vm462, %v92, 0.0
      %v577 = vsel %vm463, %v93, 0.0
      %v578 = vsel %vm464, %v94, 0.0
      %v579 = vsel %vm465, %v95, 0.0
      %v580 = vsel %vm466, %v96, 0.0
      %v581 = vsel %vm467, %v97, 0.0
      %v582 = vsel %vm468, %v98, 0.0
      %v583 = vsel %vm469, %v99, 0.0
      %v584 = vsel %vm470, %v100, 0.0
      %v585 = vsel %vm471, %v101, 0.0
      %v586 = vsel %vm472, %v102, 0.0
      %v587 = vsel %vm473, %v103, 0.0
      %v588 = vsel %vm474, %v104, 0.0
      %v589 = vsel %vm475, %v105, 0.0
      %v590 = vsel %vm476, %v106, 0.0
      %v591 = vsel %vm477, %v107, 0.0
      %v592 = vadd.f32 %v536, %v538
      %v593 = vadd.f32 %v592, %v540
      %v594 = vadd.f32 %v593, %v542
      %v595 = vadd.f32 %v594, %v544
      %v596 = vadd.f32 %v595, %v546
      %v597 = vadd.f32 %v596, %v548
      %v598 = vadd.f32 %v597, %v550
      %v599 = vadd.f32 %v598, %v552
      %v600 = vadd.f32 %v599, %v554
      %v601 = vadd.f32 %v600, %v556
      %v602 = vadd.f32 %v601, %v558
      %v603 = vadd.f32 %v602, %v560
      %v604 = vadd.f32 %v603, %v562
      %v605 = vadd.f32 %v604, %v564
      %v606 = vadd.f32 %v605, %v566
      %v607 = vadd.f32 %v606, %v568
      %v608 = vadd.f32 %v607, %v570
      %v609 = vadd.f32 %v608, %v572
      %v610 = vadd.f32 %v609, %v574
      %v611 = vadd.f32 %v610, %v576
      %v612 = vadd.f32 %v611, %v578
      %v613 = vadd.f32 %v612, %v580
      %v614 = vadd.f32 %v613, %v582
      %v615 = vadd.f32 %v614, %v584
      %v616 = vadd.f32 %v615, %v586
      %v617 = vadd.f32 %v616, %v588
      %v618 = vadd.f32 %v617, %v590
      %v619 = vadd.f32 %v537, %v539
      %v620 = vadd.f32 %v619, %v541
      %v621 = vadd.f32 %v620, %v543
      %v622 = vadd.f32 %v621, %v545
      %v623 = vadd.f32 %v622, %v547
      %v624 = vadd.f32 %v623, %v549
      %v625 = vadd.f32 %v624, %v551
      %v626 = vadd.f32 %v625, %v553
      %v627 = vadd.f32 %v626, %v555
      %v628 = vadd.f32 %v627, %v557
      %v629 = vadd.f32 %v628, %v559
      %v630 = vadd.f32 %v629, %v561
      %v631 = vadd.f32 %v630, %v563
      %v632 = vadd.f32 %v631, %v565
      %v633 = vadd.f32 %v632, %v567
      %v634 = vadd.f32 %v633, %v569
      %v635 = vadd.f32 %v634, %v571
      %v636 = vadd.f32 %v635, %v573
      %v637 = vadd.f32 %v636, %v575
      %v638 = vadd.f32 %v637, %v577
      %v639 = vadd.f32 %v638, %v579
      %v640 = vadd.f32 %v639, %v581
      %v641 = vadd.f32 %v640, %v583
      %v642 = vadd.f32 %v641, %v585
      %v643 = vadd.f32 %v642, %v587
      %v644 = vadd.f32 %v643, %v589
      %v645 = vadd.f32 %v644, %v591
      %v646 = vadd.f32 %v534, %v618
      %v647 = vadd.f32 %v535, %v645
      %648 = vst [vmem:[#allocation2] sm:$0xff] %v646
      %649 = vst [vmem:[#allocation2 + $0x8] sm:$0xff] %v647
      %v650 = vld [vmem:[#allocation3] sm:$0xff]
      %v651 = vld [vmem:[#allocation3 + $0x8] sm:$0xff]
      %v652 = vsel %vm422, 1, 0
      %v653 = vsel %vm423, 1, 0
      %v654 = vsel %vm424, 1, 0
      %v655 = vsel %vm425, 1, 0
      %v656 = vsel %vm426, 1, 0
      %v657 = vsel %vm427, 1, 0
      %v658 = vsel %vm428, 1, 0
      %v659 = vsel %vm429, 1, 0
      %v660 = vsel %vm430, 1, 0
      %v661 = vsel %vm431, 1, 0
      %v662 = vsel %vm432, 1, 0
      %v663 = vsel %vm433, 1, 0
      %v664 = vsel %vm434, 1, 0
      %v665 = vsel %vm435, 1, 0
      %v666 = vsel %vm436, 1, 0
      %v667 = vsel %vm437, 1, 0
      %v668 = vsel %vm438, 1, 0
      %v669 = vsel %vm439, 1, 0
      %v670 = vsel %vm440, 1, 0
      %v671 = vsel %vm441, 1, 0
      %v672 = vsel %vm442, 1, 0
      %v673 = vsel %vm443, 1, 0
      %v674 = vsel %vm444, 1, 0
      %v675 = vsel %vm445, 1, 0
      %v676 = vsel %vm446, 1, 0
      %v677 = vsel %vm447, 1, 0
      %v678 = vsel %vm448, 1, 0
      %v679 = vsel %vm449, 1, 0
      %v680 = vsel %vm450, 1, 0
      %v681 = vsel %vm451, 1, 0
      %v682 = vsel %vm452, 1, 0
      %v683 = vsel %vm453, 1, 0
      %v684 = vsel %vm454, 1, 0
      %v685 = vsel %vm455, 1, 0
      %v686 = vsel %vm456, 1, 0
      %v687 = vsel %vm457, 1, 0
      %v688 = vsel %vm458, 1, 0
      %v689 = vsel %vm459, 1, 0
      %v690 = vsel %vm460, 1, 0
      %v691 = vsel %vm461, 1, 0
      %v692 = vsel %vm462, 1, 0
      %v693 = vsel %vm463, 1, 0
      %v694 = vsel %vm464, 1, 0
      %v695 = vsel %vm465, 1, 0
      %v696 = vsel %vm466, 1, 0
      %v697 = vsel %vm467, 1, 0
      %v698 = vsel %vm468, 1, 0
      %v699 = vsel %vm469, 1, 0
      %v700 = vsel %vm470, 1, 0
      %v701 = vsel %vm471, 1, 0
      %v702 = vsel %vm472, 1, 0
      %v703 = vsel %vm473, 1, 0
      %v704 = vsel %vm474, 1, 0
      %v705 = vsel %vm475, 1, 0
      %v706 = vsel %vm476, 1, 0
      %v707 = vsel %vm477, 1, 0
      %v708 = vcvt.s32.f32 %v652
      %v709 = vcvt.s32.f32 %v653
      %v710 = vcvt.s32.f32 %v654
      %v711 = vcvt.s32.f32 %v655
      %v712 = vcvt.s32.f32 %v656
      %v713 = vcvt.s32.f32 %v657
      %v714 = vcvt.s32.f32 %v658
      %v715 = vcvt.s32.f32 %v659
      %v716 = vcvt.s32.f32 %v660
      %v717 = vcvt.s32.f32 %v661
      %v718 = vcvt.s32.f32 %v662
      %v719 = vcvt.s32.f32 %v663
      %v720 = vcvt.s32.f32 %v664
      %v721 = vcvt.s32.f32 %v665
      %v722 = vcvt.s32.f32 %v666
      %v723 = vcvt.s32.f32 %v667
      %v724 = vcvt.s32.f32 %v668
      %v725 = vcvt.s32.f32 %v669
      %v726 = vcvt.s32.f32 %v670
      %v727 = vcvt.s32.f32 %v671
      %v728 = vcvt.s32.f32 %v672
      %v729 = vcvt.s32.f32 %v673
      %v730 = vcvt.s32.f32 %v674
      %v731 = vcvt.s32.f32 %v675
      %v732 = vcvt.s32.f32 %v676
      %v733 = vcvt.s32.f32 %v677
      %v734 = vcvt.s32.f32 %v678
      %v735 = vcvt.s32.f32 %v679
      %v736 = vcvt.s32.f32 %v680
      %v737 = vcvt.s32.f32 %v681
      %v738 = vcvt.s32.f32 %v682
      %v739 = vcvt.s32.f32 %v683
      %v740 = vcvt.s32.f32 %v684
      %v741 = vcvt.s32.f32 %v685
      %v742 = vcvt.s32.f32 %v686
      %v743 = vcvt.s32.f32 %v687
      %v744 = vcvt.s32.f32 %v688
      %v745 = vcvt.s32.f32 %v689
      %v746 = vcvt.s32.f32 %v690
      %v747 = vcvt.s32.f32 %v691
      %v748 = vcvt.s32.f32 %v692
      %v749 = vcvt.s32.f32 %v693
      %v750 = vcvt.s32.f32 %v694
      %v751 = vcvt.s32.f32 %v695
      %v752 = vcvt.s32.f32 %v696
      %v753 = vcvt.s32.f32 %v697
      %v754 = vcvt.s32.f32 %v698
      %v755 = vcvt.s32.f32 %v699
      %v756 = vcvt.s32.f32 %v700
      %v757 = vcvt.s32.f32 %v701
      %v758 = vcvt.s32.f32 %v702
      %v759 = vcvt.s32.f32 %v703
      %v760 = vcvt.s32.f32 %v704
      %v761 = vcvt.s32.f32 %v705
      %v762 = vcvt.s32.f32 %v706
      %v763 = vcvt.s32.f32 %v707
      %v764 = vadd.f32 %v708, %v710
      %v765 = vadd.f32 %v764, %v712
      %v766 = vadd.f32 %v765, %v714
      %v767 = vadd.f32 %v766, %v716
      %v768 = vadd.f32 %v767, %v718
      %v769 = vadd.f32 %v768, %v720
      %v770 = vadd.f32 %v769, %v722
      %v771 = vadd.f32 %v770, %v724
      %v772 = vadd.f32 %v771, %v726
      %v773 = vadd.f32 %v772, %v728
      %v774 = vadd.f32 %v773, %v730
      %v775 = vadd.f32 %v774, %v732
      %v776 = vadd.f32 %v775, %v734
      %v777 = vadd.f32 %v776, %v736
      %v778 = vadd.f32 %v777, %v738
      %v779 = vadd.f32 %v778, %v740
      %v780 = vadd.f32 %v779, %v742
      %v781 = vadd.f32 %v780, %v744
      %v782 = vadd.f32 %v781, %v746
      %v783 = vadd.f32 %v782, %v748
      %v784 = vadd.f32 %v783, %v750
      %v785 = vadd.f32 %v784, %v752
      %v786 = vadd.f32 %v785, %v754
      %v787 = vadd.f32 %v786, %v756
      %v788 = vadd.f32 %v787, %v758
      %v789 = vadd.f32 %v788, %v760
      %v790 = vadd.f32 %v789, %v762
      %v791 = vadd.f32 %v709, %v711
      %v792 = vadd.f32 %v791, %v713
      %v793 = vadd.f32 %v792, %v715
      %v794 = vadd.f32 %v793, %v717
      %v795 = vadd.f32 %v794, %v719
      %v796 = vadd.f32 %v795, %v721
      %v797 = vadd.f32 %v796, %v723
      %v798 = vadd.f32 %v797, %v725
      %v799 = vadd.f32 %v798, %v727
      %v800 = vadd.f32 %v799, %v729
      %v801 = vadd.f32 %v800, %v731
      %v802 = vadd.f32 %v801, %v733
      %v803 = vadd.f32 %v802, %v735
      %v804 = vadd.f32 %v803, %v737
      %v805 = vadd.f32 %v804, %v739
      %v806 = vadd.f32 %v805, %v741
      %v807 = vadd.f32 %v806, %v743
      %v808 = vadd.f32 %v807, %v745
      %v809 = vadd.f32 %v808, %v747
      %v810 = vadd.f32 %v809, %v749
      %v811 = vadd.f32 %v810, %v751
      %v812 = vadd.f32 %v811, %v753
      %v813 = vadd.f32 %v812, %v755
      %v814 = vadd.f32 %v813, %v757
      %v815 = vadd.f32 %v814, %v759
      %v816 = vadd.f32 %v815, %v761
      %v817 = vadd.f32 %v816, %v763
      %v818 = vadd.f32 %v650, %v790
      %v819 = vadd.f32 %v651, %v817
      %820 = vst [vmem:[#allocation3] sm:$0xff] %v818
      %821 = vst [vmem:[#allocation3 + $0x8] sm:$0xff] %v819
      %v822 = vld [vmem:[#allocation4] sm:$0xff]
      %v823 = vld [vmem:[#allocation4 + $0x8] sm:$0xff]
      %v824 = vsel %vm478, %v52, 0.0
      %v825 = vsel %vm479, %v53, 0.0
      %v826 = vsel %vm480, %v54, 0.0
      %v827 = vsel %vm481, %v55, 0.0
      %v828 = vsel %vm482, %v56, 0.0
      %v829 = vsel %vm483, %v57, 0.0
      %v830 = vsel %vm484, %v58, 0.0
      %v831 = vsel %vm485, %v59, 0.0
      %v832 = vsel %vm486, %v60, 0.0
      %v833 = vsel %vm487, %v61, 0.0
      %v834 = vsel %vm488, %v62, 0.0
      %v835 = vsel %vm489, %v63, 0.0
      %v836 = vsel %vm490, %v64, 0.0
      %v837 = vsel %vm491, %v65, 0.0
      %v838 = vsel %vm492, %v66, 0.0
      %v839 = vsel %vm493, %v67, 0.0
      %v840 = vsel %vm494, %v68, 0.0
      %v841 = vsel %vm495, %v69, 0.0
      %v842 = vsel %vm496, %v70, 0.0
      %v843 = vsel %vm497, %v71, 0.0
      %v844 = vsel %vm498, %v72, 0.0
      %v845 = vsel %vm499, %v73, 0.0
      %v846 = vsel %vm500, %v74, 0.0
      %v847 = vsel %vm501, %v75, 0.0
      %v848 = vsel %vm502, %v76, 0.0
      %v849 = vsel %vm503, %v77, 0.0
      %v850 = vsel %vm504, %v78, 0.0
      %v851 = vsel %vm505, %v79, 0.0
      %v852 = vsel %vm506, %v80, 0.0
      %v853 = vsel %vm507, %v81, 0.0
      %v854 = vsel %vm508, %v82, 0.0
      %v855 = vsel %vm509, %v83, 0.0
      %v856 = vsel %vm510, %v84, 0.0
      %v857 = vsel %vm511, %v85, 0.0
      %v858 = vsel %vm512, %v86, 0.0
      %v859 = vsel %vm513, %v87, 0.0
      %v860 = vsel %vm514, %v88, 0.0
      %v861 = vsel %vm515, %v89, 0.0
      %v862 = vsel %vm516, %v90, 0.0
      %v863 = vsel %vm517, %v91, 0.0
      %v864 = vsel %vm518, %v92, 0.0
      %v865 = vsel %vm519, %v93, 0.0
      %v866 = vsel %vm520, %v94, 0.0
      %v867 = vsel %vm521, %v95, 0.0
      %v868 = vsel %vm522, %v96, 0.0
      %v869 = vsel %vm523, %v97, 0.0
      %v870 = vsel %vm524, %v98, 0.0
      %v871 = vsel %vm525, %v99, 0.0
      %v872 = vsel %vm526, %v100, 0.0
      %v873 = vsel %vm527, %v101, 0.0
      %v874 = vsel %vm528, %v102, 0.0
      %v875 = vsel %vm529, %v103, 0.0
      %v876 = vsel %vm530, %v104, 0.0
      %v877 = vsel %vm531, %v105, 0.0
      %v878 = vsel %vm532, %v106, 0.0
      %v879 = vsel %vm533, %v107, 0.0
      %v880 = vadd.f32 %v824, %v826
      %v881 = vadd.f32 %v880, %v828
      %v882 = vadd.f32 %v881, %v830
      %v883 = vadd.f32 %v882, %v832
      %v884 = vadd.f32 %v883, %v834
      %v885 = vadd.f32 %v884, %v836
      %v886 = vadd.f32 %v885, %v838
      %v887 = vadd.f32 %v886, %v840
      %v888 = vadd.f32 %v887, %v842
      %v889 = vadd.f32 %v888, %v844
      %v890 = vadd.f32 %v889, %v846
      %v891 = vadd.f32 %v890, %v848
      %v892 = vadd.f32 %v891, %v850
      %v893 = vadd.f32 %v892, %v852
      %v894 = vadd.f32 %v893, %v854
      %v895 = vadd.f32 %v894, %v856
      %v896 = vadd.f32 %v895, %v858
      %v897 = vadd.f32 %v896, %v860
      %v898 = vadd.f32 %v897, %v862
      %v899 = vadd.f32 %v898, %v864
      %v900 = vadd.f32 %v899, %v866
      %v901 = vadd.f32 %v900, %v868
      %v902 = vadd.f32 %v901, %v870
      %v903 = vadd.f32 %v902, %v872
      %v904 = vadd.f32 %v903, %v874
      %v905 = vadd.f32 %v904, %v876
      %v906 = vadd.f32 %v905, %v878
      %v907 = vadd.f32 %v825, %v827
      %v908 = vadd.f32 %v907, %v829
      %v909 = vadd.f32 %v908, %v831
      %v910 = vadd.f32 %v909, %v833
      %v911 = vadd.f32 %v910, %v835
      %v912 = vadd.f32 %v911, %v837
      %v913 = vadd.f32 %v912, %v839
      %v914 = vadd.f32 %v913, %v841
      %v915 = vadd.f32 %v914, %v843
      %v916 = vadd.f32 %v915, %v845
      %v917 = vadd.f32 %v916, %v847
      %v918 = vadd.f32 %v917, %v849
      %v919 = vadd.f32 %v918, %v851
      %v920 = vadd.f32 %v919, %v853
      %v921 = vadd.f32 %v920, %v855
      %v922 = vadd.f32 %v921, %v857
      %v923 = vadd.f32 %v922, %v859
      %v924 = vadd.f32 %v923, %v861
      %v925 = vadd.f32 %v924, %v863
      %v926 = vadd.f32 %v925, %v865
      %v927 = vadd.f32 %v926, %v867
      %v928 = vadd.f32 %v927, %v869
      %v929 = vadd.f32 %v928, %v871
      %v930 = vadd.f32 %v929, %v873
      %v931 = vadd.f32 %v930, %v875
      %v932 = vadd.f32 %v931, %v877
      %v933 = vadd.f32 %v932, %v879
      %v934 = vadd.f32 %v822, %v906
      %v935 = vadd.f32 %v823, %v933
      %936 = vst [vmem:[#allocation4] sm:$0xff] %v934
      %937 = vst [vmem:[#allocation4 + $0x8] sm:$0xff] %v935
      %v938 = vld [vmem:[#allocation5] sm:$0xff]
      %v939 = vld [vmem:[#allocation5 + $0x8] sm:$0xff]
      %v940 = vsel %vm478, 1, 0
      %v941 = vsel %vm479, 1, 0
      %v942 = vsel %vm480, 1, 0
      %v943 = vsel %vm481, 1, 0
      %v944 = vsel %vm482, 1, 0
      %v945 = vsel %vm483, 1, 0
      %v946 = vsel %vm484, 1, 0
      %v947 = vsel %vm485, 1, 0
      %v948 = vsel %vm486, 1, 0
      %v949 = vsel %vm487, 1, 0
      %v950 = vsel %vm488, 1, 0
      %v951 = vsel %vm489, 1, 0
      %v952 = vsel %vm490, 1, 0
      %v953 = vsel %vm491, 1, 0
      %v954 = vsel %vm492, 1, 0
      %v955 = vsel %vm493, 1, 0
      %v956 = vsel %vm494, 1, 0
      %v957 = vsel %vm495, 1, 0
      %v958 = vsel %vm496, 1, 0
      %v959 = vsel %vm497, 1, 0
      %v960 = vsel %vm498, 1, 0
      %v961 = vsel %vm499, 1, 0
      %v962 = vsel %vm500, 1, 0
      %v963 = vsel %vm501, 1, 0
      %v964 = vsel %vm502, 1, 0
      %v965 = vsel %vm503, 1, 0
      %v966 = vsel %vm504, 1, 0
      %v967 = vsel %vm505, 1, 0
      %v968 = vsel %vm506, 1, 0
      %v969 = vsel %vm507, 1, 0
      %v970 = vsel %vm508, 1, 0
      %v971 = vsel %vm509, 1, 0
      %v972 = vsel %vm510, 1, 0
      %v973 = vsel %vm511, 1, 0
      %v974 = vsel %vm512, 1, 0
      %v975 = vsel %vm513, 1, 0
      %v976 = vsel %vm514, 1, 0
      %v977 = vsel %vm515, 1, 0
      %v978 = vsel %vm516, 1, 0
      %v979 = vsel %vm517, 1, 0
      %v980 = vsel %vm518, 1, 0
      %v981 = vsel %vm519, 1, 0
      %v982 = vsel %vm520, 1, 0
      %v983 = vsel %vm521, 1, 0
      %v984 = vsel %vm522, 1, 0
      %v985 = vsel %vm523, 1, 0
      %v986 = vsel %vm524, 1, 0
      %v987 = vsel %vm525, 1, 0
      %v988 = vsel %vm526, 1, 0
      %v989 = vsel %vm527, 1, 0
      %v990 = vsel %vm528, 1, 0
      %v991 = vsel %vm529, 1, 0
      %v992 = vsel %vm530, 1, 0
      %v993 = vsel %vm531, 1, 0
      %v994 = vsel %vm532, 1, 0
      %v995 = vsel %vm533, 1, 0
      %v996 = vcvt.s32.f32 %v940
      %v997 = vcvt.s32.f32 %v941
      %v998 = vcvt.s32.f32 %v942
      %v999 = vcvt.s32.f32 %v943
      %v1000 = vcvt.s32.f32 %v944
      %v1001 = vcvt.s32.f32 %v945
      %v1002 = vcvt.s32.f32 %v946
      %v1003 = vcvt.s32.f32 %v947
      %v1004 = vcvt.s32.f32 %v948
      %v1005 = vcvt.s32.f32 %v949
      %v1006 = vcvt.s32.f32 %v950
      %v1007 = vcvt.s32.f32 %v951
      %v1008 = vcvt.s32.f32 %v952
      %v1009 = vcvt.s32.f32 %v953
      %v1010 = vcvt.s32.f32 %v954
      %v1011 = vcvt.s32.f32 %v955
      %v1012 = vcvt.s32.f32 %v956
      %v1013 = vcvt.s32.f32 %v957
      %v1014 = vcvt.s32.f32 %v958
      %v1015 = vcvt.s32.f32 %v959
      %v1016 = vcvt.s32.f32 %v960
      %v1017 = vcvt.s32.f32 %v961
      %v1018 = vcvt.s32.f32 %v962
      %v1019 = vcvt.s32.f32 %v963
      %v1020 = vcvt.s32.f32 %v964
      %v1021 = vcvt.s32.f32 %v965
      %v1022 = vcvt.s32.f32 %v966
      %v1023 = vcvt.s32.f32 %v967
      %v1024 = vcvt.s32.f32 %v968
      %v1025 = vcvt.s32.f32 %v969
      %v1026 = vcvt.s32.f32 %v970
      %v1027 = vcvt.s32.f32 %v971
      %v1028 = vcvt.s32.f32 %v972
      %v1029 = vcvt.s32.f32 %v973
      %v1030 = vcvt.s32.f32 %v974
      %v1031 = vcvt.s32.f32 %v975
      %v1032 = vcvt.s32.f32 %v976
      %v1033 = vcvt.s32.f32 %v977
      %v1034 = vcvt.s32.f32 %v978
      %v1035 = vcvt.s32.f32 %v979
      %v1036 = vcvt.s32.f32 %v980
      %v1037 = vcvt.s32.f32 %v981
      %v1038 = vcvt.s32.f32 %v982
      %v1039 = vcvt.s32.f32 %v983
      %v1040 = vcvt.s32.f32 %v984
      %v1041 = vcvt.s32.f32 %v985
      %v1042 = vcvt.s32.f32 %v986
      %v1043 = vcvt.s32.f32 %v987
      %v1044 = vcvt.s32.f32 %v988
      %v1045 = vcvt.s32.f32 %v989
      %v1046 = vcvt.s32.f32 %v990
      %v1047 = vcvt.s32.f32 %v991
      %v1048 = vcvt.s32.f32 %v992
      %v1049 = vcvt.s32.f32 %v993
      %v1050 = vcvt.s32.f32 %v994
      %v1051 = vcvt.s32.f32 %v995
      %v1052 = vadd.f32 %v996, %v998
      %v1053 = vadd.f32 %v1052, %v1000
      %v1054 = vadd.f32 %v1053, %v1002
      %v1055 = vadd.f32 %v1054, %v1004
      %v1056 = vadd.f32 %v1055, %v1006
      %v1057 = vadd.f32 %v1056, %v1008
      %v1058 = vadd.f32 %v1057, %v1010
      %v1059 = vadd.f32 %v1058, %v1012
      %v1060 = vadd.f32 %v1059, %v1014
      %v1061 = vadd.f32 %v1060, %v1016
      %v1062 = vadd.f32 %v1061, %v1018
      %v1063 = vadd.f32 %v1062, %v1020
      %v1064 = vadd.f32 %v1063, %v1022
      %v1065 = vadd.f32 %v1064, %v1024
      %v1066 = vadd.f32 %v1065, %v1026
      %v1067 = vadd.f32 %v1066, %v1028
      %v1068 = vadd.f32 %v1067, %v1030
      %v1069 = vadd.f32 %v1068, %v1032
      %v1070 = vadd.f32 %v1069, %v1034
      %v1071 = vadd.f32 %v1070, %v1036
      %v1072 = vadd.f32 %v1071, %v1038
      %v1073 = vadd.f32 %v1072, %v1040
      %v1074 = vadd.f32 %v1073, %v1042
      %v1075 = vadd.f32 %v1074, %v1044
      %v1076 = vadd.f32 %v1075, %v1046
      %v1077 = vadd.f32 %v1076, %v1048
      %v1078 = vadd.f32 %v1077, %v1050
      %v1079 = vadd.f32 %v997, %v999
      %v1080 = vadd.f32 %v1079, %v1001
      %v1081 = vadd.f32 %v1080, %v1003
      %v1082 = vadd.f32 %v1081, %v1005
      %v1083 = vadd.f32 %v1082, %v1007
      %v1084 = vadd.f32 %v1083, %v1009
      %v1085 = vadd.f32 %v1084, %v1011
      %v1086 = vadd.f32 %v1085, %v1013
      %v1087 = vadd.f32 %v1086, %v1015
      %v1088 = vadd.f32 %v1087, %v1017
      %v1089 = vadd.f32 %v1088, %v1019
      %v1090 = vadd.f32 %v1089, %v1021
      %v1091 = vadd.f32 %v1090, %v1023
      %v1092 = vadd.f32 %v1091, %v1025
      %v1093 = vadd.f32 %v1092, %v1027
      %v1094 = vadd.f32 %v1093, %v1029
      %v1095 = vadd.f32 %v1094, %v1031
      %v1096 = vadd.f32 %v1095, %v1033
      %v1097 = vadd.f32 %v1096, %v1035
      %v1098 = vadd.f32 %v1097, %v1037
      %v1099 = vadd.f32 %v1098, %v1039
      %v1100 = vadd.f32 %v1099, %v1041
      %v1101 = vadd.f32 %v1100, %v1043
      %v1102 = vadd.f32 %v1101, %v1045
      %v1103 = vadd.f32 %v1102, %v1047
      %v1104 = vadd.f32 %v1103, %v1049
      %v1105 = vadd.f32 %v1104, %v1051
      %v1106 = vadd.f32 %v938, %v1078
      %v1107 = vadd.f32 %v939, %v1105
      %1108 = vst [vmem:[#allocation5] sm:$0xff] %v1106
      %1109 = vst [vmem:[#allocation5 + $0x8] sm:$0xff] %v1107
    $region25: #{tpu_custom_call.1} parent=1 // pred_fallthru
      _
    %p1110 = scmp.ne.s32.totalorder 0, 0
    // Predicated region
    $region26: #{tpu_custom_call.1} parent=1 // pred_check
      %p1111 = pneg %p1110
    $region27: #{tpu_custom_call.1} parent=1 // pred_check_branch
      %1113 = sbr.rel (%p1111) target = $region29
    $region28: #{tpu_custom_call.1} parent=1 // pred_region
      %v1114 = vld [vmem:[#allocation2] sm:$0xff]
      %v1115 = vld [vmem:[#allocation2 + $0x8] sm:$0xff]
      %v1116 = vsel %vm164, %v52, 0.0
      %v1117 = vsel %vm165, %v53, 0.0
      %v1118 = vsel %vm166, %v54, 0.0
      %v1119 = vsel %vm167, %v55, 0.0
      %v1120 = vsel %vm168, %v56, 0.0
      %v1121 = vsel %vm169, %v57, 0.0
      %v1122 = vsel %vm170, %v58, 0.0
      %v1123 = vsel %vm171, %v59, 0.0
      %v1124 = vsel %vm172, %v60, 0.0
      %v1125 = vsel %vm173, %v61, 0.0
      %v1126 = vsel %vm174, %v62, 0.0
      %v1127 = vsel %vm175, %v63, 0.0
      %v1128 = vsel %vm176, %v64, 0.0
      %v1129 = vsel %vm177, %v65, 0.0
      %v1130 = vsel %vm178, %v66, 0.0
      %v1131 = vsel %vm179, %v67, 0.0
      %v1132 = vsel %vm180, %v68, 0.0
      %v1133 = vsel %vm181, %v69, 0.0
      %v1134 = vsel %vm182, %v70, 0.0
      %v1135 = vsel %vm183, %v71, 0.0
      %v1136 = vsel %vm184, %v72, 0.0
      %v1137 = vsel %vm185, %v73, 0.0
      %v1138 = vsel %vm186, %v74, 0.0
      %v1139 = vsel %vm187, %v75, 0.0
      %v1140 = vsel %vm188, %v76, 0.0
      %v1141 = vsel %vm189, %v77, 0.0
      %v1142 = vsel %vm190, %v78, 0.0
      %v1143 = vsel %vm191, %v79, 0.0
      %v1144 = vsel %vm192, %v80, 0.0
      %v1145 = vsel %vm193, %v81, 0.0
      %v1146 = vsel %vm194, %v82, 0.0
      %v1147 = vsel %vm195, %v83, 0.0
      %v1148 = vsel %vm196, %v84, 0.0
      %v1149 = vsel %vm197, %v85, 0.0
      %v1150 = vsel %vm198, %v86, 0.0
      %v1151 = vsel %vm199, %v87, 0.0
      %v1152 = vsel %vm200, %v88, 0.0
      %v1153 = vsel %vm201, %v89, 0.0
      %v1154 = vsel %vm202, %v90, 0.0
      %v1155 = vsel %vm203, %v91, 0.0
      %v1156 = vsel %vm204, %v92, 0.0
      %v1157 = vsel %vm205, %v93, 0.0
      %v1158 = vsel %vm206, %v94, 0.0
      %v1159 = vsel %vm207, %v95, 0.0
      %v1160 = vsel %vm208, %v96, 0.0
      %v1161 = vsel %vm209, %v97, 0.0
      %v1162 = vsel %vm210, %v98, 0.0
      %v1163 = vsel %vm211, %v99, 0.0
      %v1164 = vsel %vm212, %v100, 0.0
      %v1165 = vsel %vm213, %v101, 0.0
      %v1166 = vsel %vm214, %v102, 0.0
      %v1167 = vsel %vm215, %v103, 0.0
      %v1168 = vsel %vm216, %v104, 0.0
      %v1169 = vsel %vm217, %v105, 0.0
      %v1170 = vsel %vm218, %v106, 0.0
      %v1171 = vsel %vm219, %v107, 0.0
      %v1172 = vadd.f32 %v1116, %v1118
      %v1173 = vadd.f32 %v1172, %v1120
      %v1174 = vadd.f32 %v1173, %v1122
      %v1175 = vadd.f32 %v1174, %v1124
      %v1176 = vadd.f32 %v1175, %v1126
      %v1177 = vadd.f32 %v1176, %v1128
      %v1178 = vadd.f32 %v1177, %v1130
      %v1179 = vadd.f32 %v1178, %v1132
      %v1180 = vadd.f32 %v1179, %v1134
      %v1181 = vadd.f32 %v1180, %v1136
      %v1182 = vadd.f32 %v1181, %v1138
      %v1183 = vadd.f32 %v1182, %v1140
      %v1184 = vadd.f32 %v1183, %v1142
      %v1185 = vadd.f32 %v1184, %v1144
      %v1186 = vadd.f32 %v1185, %v1146
      %v1187 = vadd.f32 %v1186, %v1148
      %v1188 = vadd.f32 %v1187, %v1150
      %v1189 = vadd.f32 %v1188, %v1152
      %v1190 = vadd.f32 %v1189, %v1154
      %v1191 = vadd.f32 %v1190, %v1156
      %v1192 = vadd.f32 %v1191, %v1158
      %v1193 = vadd.f32 %v1192, %v1160
      %v1194 = vadd.f32 %v1193, %v1162
      %v1195 = vadd.f32 %v1194, %v1164
      %v1196 = vadd.f32 %v1195, %v1166
      %v1197 = vadd.f32 %v1196, %v1168
      %v1198 = vadd.f32 %v1197, %v1170
      %v1199 = vadd.f32 %v1117, %v1119
      %v1200 = vadd.f32 %v1199, %v1121
      %v1201 = vadd.f32 %v1200, %v1123
      %v1202 = vadd.f32 %v1201, %v1125
      %v1203 = vadd.f32 %v1202, %v1127
      %v1204 = vadd.f32 %v1203, %v1129
      %v1205 = vadd.f32 %v1204, %v1131
      %v1206 = vadd.f32 %v1205, %v1133
      %v1207 = vadd.f32 %v1206, %v1135
      %v1208 = vadd.f32 %v1207, %v1137
      %v1209 = vadd.f32 %v1208, %v1139
      %v1210 = vadd.f32 %v1209, %v1141
      %v1211 = vadd.f32 %v1210, %v1143
      %v1212 = vadd.f32 %v1211, %v1145
      %v1213 = vadd.f32 %v1212, %v1147
      %v1214 = vadd.f32 %v1213, %v1149
      %v1215 = vadd.f32 %v1214, %v1151
      %v1216 = vadd.f32 %v1215, %v1153
      %v1217 = vadd.f32 %v1216, %v1155
      %v1218 = vadd.f32 %v1217, %v1157
      %v1219 = vadd.f32 %v1218, %v1159
      %v1220 = vadd.f32 %v1219, %v1161
      %v1221 = vadd.f32 %v1220, %v1163
      %v1222 = vadd.f32 %v1221, %v1165
      %v1223 = vadd.f32 %v1222, %v1167
      %v1224 = vadd.f32 %v1223, %v1169
      %v1225 = vadd.f32 %v1224, %v1171
      %v1226 = vadd.f32 %v1114, %v1198
      %v1227 = vadd.f32 %v1115, %v1225
      %1228 = vst [vmem:[#allocation2] sm:$0xff] %v1226
      %1229 = vst [vmem:[#allocation2 + $0x8] sm:$0xff] %v1227
      %v1230 = vld [vmem:[#allocation3] sm:$0xff]
      %v1231 = vld [vmem:[#allocation3 + $0x8] sm:$0xff]
      %v1232 = vsel %vm164, 1, 0
      %v1233 = vsel %vm165, 1, 0
      %v1234 = vsel %vm166, 1, 0
      %v1235 = vsel %vm167, 1, 0
      %v1236 = vsel %vm168, 1, 0
      %v1237 = vsel %vm169, 1, 0
      %v1238 = vsel %vm170, 1, 0
      %v1239 = vsel %vm171, 1, 0
      %v1240 = vsel %vm172, 1, 0
      %v1241 = vsel %vm173, 1, 0
      %v1242 = vsel %vm174, 1, 0
      %v1243 = vsel %vm175, 1, 0
      %v1244 = vsel %vm176, 1, 0
      %v1245 = vsel %vm177, 1, 0
      %v1246 = vsel %vm178, 1, 0
      %v1247 = vsel %vm179, 1, 0
      %v1248 = vsel %vm180, 1, 0
      %v1249 = vsel %vm181, 1, 0
      %v1250 = vsel %vm182, 1, 0
      %v1251 = vsel %vm183, 1, 0
      %v1252 = vsel %vm184, 1, 0
      %v1253 = vsel %vm185, 1, 0
      %v1254 = vsel %vm186, 1, 0
      %v1255 = vsel %vm187, 1, 0
      %v1256 = vsel %vm188, 1, 0
      %v1257 = vsel %vm189, 1, 0
      %v1258 = vsel %vm190, 1, 0
      %v1259 = vsel %vm191, 1, 0
      %v1260 = vsel %vm192, 1, 0
      %v1261 = vsel %vm193, 1, 0
      %v1262 = vsel %vm194, 1, 0
      %v1263 = vsel %vm195, 1, 0
      %v1264 = vsel %vm196, 1, 0
      %v1265 = vsel %vm197, 1, 0
      %v1266 = vsel %vm198, 1, 0
      %v1267 = vsel %vm199, 1, 0
      %v1268 = vsel %vm200, 1, 0
      %v1269 = vsel %vm201, 1, 0
      %v1270 = vsel %vm202, 1, 0
      %v1271 = vsel %vm203, 1, 0
      %v1272 = vsel %vm204, 1, 0
      %v1273 = vsel %vm205, 1, 0
      %v1274 = vsel %vm206, 1, 0
      %v1275 = vsel %vm207, 1, 0
      %v1276 = vsel %vm208, 1, 0
      %v1277 = vsel %vm209, 1, 0
      %v1278 = vsel %vm210, 1, 0
      %v1279 = vsel %vm211, 1, 0
      %v1280 = vsel %vm212, 1, 0
      %v1281 = vsel %vm213, 1, 0
      %v1282 = vsel %vm214, 1, 0
      %v1283 = vsel %vm215, 1, 0
      %v1284 = vsel %vm216, 1, 0
      %v1285 = vsel %vm217, 1, 0
      %v1286 = vsel %vm218, 1, 0
      %v1287 = vsel %vm219, 1, 0
      %v1288 = vcvt.s32.f32 %v1232
      %v1289 = vcvt.s32.f32 %v1233
      %v1290 = vcvt.s32.f32 %v1234
      %v1291 = vcvt.s32.f32 %v1235
      %v1292 = vcvt.s32.f32 %v1236
      %v1293 = vcvt.s32.f32 %v1237
      %v1294 = vcvt.s32.f32 %v1238
      %v1295 = vcvt.s32.f32 %v1239
      %v1296 = vcvt.s32.f32 %v1240
      %v1297 = vcvt.s32.f32 %v1241
      %v1298 = vcvt.s32.f32 %v1242
      %v1299 = vcvt.s32.f32 %v1243
      %v1300 = vcvt.s32.f32 %v1244
      %v1301 = vcvt.s32.f32 %v1245
      %v1302 = vcvt.s32.f32 %v1246
      %v1303 = vcvt.s32.f32 %v1247
      %v1304 = vcvt.s32.f32 %v1248
      %v1305 = vcvt.s32.f32 %v1249
      %v1306 = vcvt.s32.f32 %v1250
      %v1307 = vcvt.s32.f32 %v1251
      %v1308 = vcvt.s32.f32 %v1252
      %v1309 = vcvt.s32.f32 %v1253
      %v1310 = vcvt.s32.f32 %v1254
      %v1311 = vcvt.s32.f32 %v1255
      %v1312 = vcvt.s32.f32 %v1256
      %v1313 = vcvt.s32.f32 %v1257
      %v1314 = vcvt.s32.f32 %v1258
      %v1315 = vcvt.s32.f32 %v1259
      %v1316 = vcvt.s32.f32 %v1260
      %v1317 = vcvt.s32.f32 %v1261
      %v1318 = vcvt.s32.f32 %v1262
      %v1319 = vcvt.s32.f32 %v1263
      %v1320 = vcvt.s32.f32 %v1264
      %v1321 = vcvt.s32.f32 %v1265
      %v1322 = vcvt.s32.f32 %v1266
      %v1323 = vcvt.s32.f32 %v1267
      %v1324 = vcvt.s32.f32 %v1268
      %v1325 = vcvt.s32.f32 %v1269
      %v1326 = vcvt.s32.f32 %v1270
      %v1327 = vcvt.s32.f32 %v1271
      %v1328 = vcvt.s32.f32 %v1272
      %v1329 = vcvt.s32.f32 %v1273
      %v1330 = vcvt.s32.f32 %v1274
      %v1331 = vcvt.s32.f32 %v1275
      %v1332 = vcvt.s32.f32 %v1276
      %v1333 = vcvt.s32.f32 %v1277
      %v1334 = vcvt.s32.f32 %v1278
      %v1335 = vcvt.s32.f32 %v1279
      %v1336 = vcvt.s32.f32 %v1280
      %v1337 = vcvt.s32.f32 %v1281
      %v1338 = vcvt.s32.f32 %v1282
      %v1339 = vcvt.s32.f32 %v1283
      %v1340 = vcvt.s32.f32 %v1284
      %v1341 = vcvt.s32.f32 %v1285
      %v1342 = vcvt.s32.f32 %v1286
      %v1343 = vcvt.s32.f32 %v1287
      %v1344 = vadd.f32 %v1288, %v1290
      %v1345 = vadd.f32 %v1344, %v1292
      %v1346 = vadd.f32 %v1345, %v1294
      %v1347 = vadd.f32 %v1346, %v1296
      %v1348 = vadd.f32 %v1347, %v1298
      %v1349 = vadd.f32 %v1348, %v1300
      %v1350 = vadd.f32 %v1349, %v1302
      %v1351 = vadd.f32 %v1350, %v1304
      %v1352 = vadd.f32 %v1351, %v1306
      %v1353 = vadd.f32 %v1352, %v1308
      %v1354 = vadd.f32 %v1353, %v1310
      %v1355 = vadd.f32 %v1354, %v1312
      %v1356 = vadd.f32 %v1355, %v1314
      %v1357 = vadd.f32 %v1356, %v1316
      %v1358 = vadd.f32 %v1357, %v1318
      %v1359 = vadd.f32 %v1358, %v1320
      %v1360 = vadd.f32 %v1359, %v1322
      %v1361 = vadd.f32 %v1360, %v1324
      %v1362 = vadd.f32 %v1361, %v1326
      %v1363 = vadd.f32 %v1362, %v1328
      %v1364 = vadd.f32 %v1363, %v1330
      %v1365 = vadd.f32 %v1364, %v1332
      %v1366 = vadd.f32 %v1365, %v1334
      %v1367 = vadd.f32 %v1366, %v1336
      %v1368 = vadd.f32 %v1367, %v1338
      %v1369 = vadd.f32 %v1368, %v1340
      %v1370 = vadd.f32 %v1369, %v1342
      %v1371 = vadd.f32 %v1289, %v1291
      %v1372 = vadd.f32 %v1371, %v1293
      %v1373 = vadd.f32 %v1372, %v1295
      %v1374 = vadd.f32 %v1373, %v1297
      %v1375 = vadd.f32 %v1374, %v1299
      %v1376 = vadd.f32 %v1375, %v1301
      %v1377 = vadd.f32 %v1376, %v1303
      %v1378 = vadd.f32 %v1377, %v1305
      %v1379 = vadd.f32 %v1378, %v1307
      %v1380 = vadd.f32 %v1379, %v1309
      %v1381 = vadd.f32 %v1380, %v1311
      %v1382 = vadd.f32 %v1381, %v1313
      %v1383 = vadd.f32 %v1382, %v1315
      %v1384 = vadd.f32 %v1383, %v1317
      %v1385 = vadd.f32 %v1384, %v1319
      %v1386 = vadd.f32 %v1385, %v1321
      %v1387 = vadd.f32 %v1386, %v1323
      %v1388 = vadd.f32 %v1387, %v1325
      %v1389 = vadd.f32 %v1388, %v1327
      %v1390 = vadd.f32 %v1389, %v1329
      %v1391 = vadd.f32 %v1390, %v1331
      %v1392 = vadd.f32 %v1391, %v1333
      %v1393 = vadd.f32 %v1392, %v1335
      %v1394 = vadd.f32 %v1393, %v1337
      %v1395 = vadd.f32 %v1394, %v1339
      %v1396 = vadd.f32 %v1395, %v1341
      %v1397 = vadd.f32 %v1396, %v1343
      %v1398 = vadd.f32 %v1230, %v1370
      %v1399 = vadd.f32 %v1231, %v1397
      %1400 = vst [vmem:[#allocation3] sm:$0xff] %v1398
      %1401 = vst [vmem:[#allocation3 + $0x8] sm:$0xff] %v1399
      %v1402 = vld [vmem:[#allocation4] sm:$0xff]
      %v1403 = vld [vmem:[#allocation4 + $0x8] sm:$0xff]
      %v1404 = vsel %vm220, %v52, 0.0
      %v1405 = vsel %vm221, %v53, 0.0
      %v1406 = vsel %vm222, %v54, 0.0
      %v1407 = vsel %vm223, %v55, 0.0
      %v1408 = vsel %vm224, %v56, 0.0
      %v1409 = vsel %vm225, %v57, 0.0
      %v1410 = vsel %vm226, %v58, 0.0
      %v1411 = vsel %vm227, %v59, 0.0
      %v1412 = vsel %vm228, %v60, 0.0
      %v1413 = vsel %vm229, %v61, 0.0
      %v1414 = vsel %vm230, %v62, 0.0
      %v1415 = vsel %vm231, %v63, 0.0
      %v1416 = vsel %vm232, %v64, 0.0
      %v1417 = vsel %vm233, %v65, 0.0
      %v1418 = vsel %vm234, %v66, 0.0
      %v1419 = vsel %vm235, %v67, 0.0
      %v1420 = vsel %vm236, %v68, 0.0
      %v1421 = vsel %vm237, %v69, 0.0
      %v1422 = vsel %vm238, %v70, 0.0
      %v1423 = vsel %vm239, %v71, 0.0
      %v1424 = vsel %vm240, %v72, 0.0
      %v1425 = vsel %vm241, %v73, 0.0
      %v1426 = vsel %vm242, %v74, 0.0
      %v1427 = vsel %vm243, %v75, 0.0
      %v1428 = vsel %vm244, %v76, 0.0
      %v1429 = vsel %vm245, %v77, 0.0
      %v1430 = vsel %vm246, %v78, 0.0
      %v1431 = vsel %vm247, %v79, 0.0
      %v1432 = vsel %vm248, %v80, 0.0
      %v1433 = vsel %vm249, %v81, 0.0
      %v1434 = vsel %vm250, %v82, 0.0
      %v1435 = vsel %vm251, %v83, 0.0
      %v1436 = vsel %vm252, %v84, 0.0
      %v1437 = vsel %vm253, %v85, 0.0
      %v1438 = vsel %vm254, %v86, 0.0
      %v1439 = vsel %vm255, %v87, 0.0
      %v1440 = vsel %vm256, %v88, 0.0
      %v1441 = vsel %vm257, %v89, 0.0
      %v1442 = vsel %vm258, %v90, 0.0
      %v1443 = vsel %vm259, %v91, 0.0
      %v1444 = vsel %vm260, %v92, 0.0
      %v1445 = vsel %vm261, %v93, 0.0
      %v1446 = vsel %vm262, %v94, 0.0
      %v1447 = vsel %vm263, %v95, 0.0
      %v1448 = vsel %vm264, %v96, 0.0
      %v1449 = vsel %vm265, %v97, 0.0
      %v1450 = vsel %vm266, %v98, 0.0
      %v1451 = vsel %vm267, %v99, 0.0
      %v1452 = vsel %vm268, %v100, 0.0
      %v1453 = vsel %vm269, %v101, 0.0
      %v1454 = vsel %vm270, %v102, 0.0
      %v1455 = vsel %vm271, %v103, 0.0
      %v1456 = vsel %vm272, %v104, 0.0
      %v1457 = vsel %vm273, %v105, 0.0
      %v1458 = vsel %vm274, %v106, 0.0
      %v1459 = vsel %vm275, %v107, 0.0
      %v1460 = vadd.f32 %v1404, %v1406
      %v1461 = vadd.f32 %v1460, %v1408
      %v1462 = vadd.f32 %v1461, %v1410
      %v1463 = vadd.f32 %v1462, %v1412
      %v1464 = vadd.f32 %v1463, %v1414
      %v1465 = vadd.f32 %v1464, %v1416
      %v1466 = vadd.f32 %v1465, %v1418
      %v1467 = vadd.f32 %v1466, %v1420
      %v1468 = vadd.f32 %v1467, %v1422
      %v1469 = vadd.f32 %v1468, %v1424
      %v1470 = vadd.f32 %v1469, %v1426
      %v1471 = vadd.f32 %v1470, %v1428
      %v1472 = vadd.f32 %v1471, %v1430
      %v1473 = vadd.f32 %v1472, %v1432
      %v1474 = vadd.f32 %v1473, %v1434
      %v1475 = vadd.f32 %v1474, %v1436
      %v1476 = vadd.f32 %v1475, %v1438
      %v1477 = vadd.f32 %v1476, %v1440
      %v1478 = vadd.f32 %v1477, %v1442
      %v1479 = vadd.f32 %v1478, %v1444
      %v1480 = vadd.f32 %v1479, %v1446
      %v1481 = vadd.f32 %v1480, %v1448
      %v1482 = vadd.f32 %v1481, %v1450
      %v1483 = vadd.f32 %v1482, %v1452
      %v1484 = vadd.f32 %v1483, %v1454
      %v1485 = vadd.f32 %v1484, %v1456
      %v1486 = vadd.f32 %v1485, %v1458
      %v1487 = vadd.f32 %v1405, %v1407
      %v1488 = vadd.f32 %v1487, %v1409
      %v1489 = vadd.f32 %v1488, %v1411
      %v1490 = vadd.f32 %v1489, %v1413
      %v1491 = vadd.f32 %v1490, %v1415
      %v1492 = vadd.f32 %v1491, %v1417
      %v1493 = vadd.f32 %v1492, %v1419
      %v1494 = vadd.f32 %v1493, %v1421
      %v1495 = vadd.f32 %v1494, %v1423
      %v1496 = vadd.f32 %v1495, %v1425
      %v1497 = vadd.f32 %v1496, %v1427
      %v1498 = vadd.f32 %v1497, %v1429
      %v1499 = vadd.f32 %v1498, %v1431
      %v1500 = vadd.f32 %v1499, %v1433
      %v1501 = vadd.f32 %v1500, %v1435
      %v1502 = vadd.f32 %v1501, %v1437
      %v1503 = vadd.f32 %v1502, %v1439
      %v1504 = vadd.f32 %v1503, %v1441
      %v1505 = vadd.f32 %v1504, %v1443
      %v1506 = vadd.f32 %v1505, %v1445
      %v1507 = vadd.f32 %v1506, %v1447
      %v1508 = vadd.f32 %v1507, %v1449
      %v1509 = vadd.f32 %v1508, %v1451
      %v1510 = vadd.f32 %v1509, %v1453
      %v1511 = vadd.f32 %v1510, %v1455
      %v1512 = vadd.f32 %v1511, %v1457
      %v1513 = vadd.f32 %v1512, %v1459
      %v1514 = vadd.f32 %v1402, %v1486
      %v1515 = vadd.f32 %v1403, %v1513
      %1516 = vst [vmem:[#allocation4] sm:$0xff] %v1514
      %1517 = vst [vmem:[#allocation4 + $0x8] sm:$0xff] %v1515
      %v1518 = vld [vmem:[#allocation5] sm:$0xff]
      %v1519 = vld [vmem:[#allocation5 + $0x8] sm:$0xff]
      %v1520 = vsel %vm220, 1, 0
      %v1521 = vsel %vm221, 1, 0
      %v1522 = vsel %vm222, 1, 0
      %v1523 = vsel %vm223, 1, 0
      %v1524 = vsel %vm224, 1, 0
      %v1525 = vsel %vm225, 1, 0
      %v1526 = vsel %vm226, 1, 0
      %v1527 = vsel %vm227, 1, 0
      %v1528 = vsel %vm228, 1, 0
      %v1529 = vsel %vm229, 1, 0
      %v1530 = vsel %vm230, 1, 0
      %v1531 = vsel %vm231, 1, 0
      %v1532 = vsel %vm232, 1, 0
      %v1533 = vsel %vm233, 1, 0
      %v1534 = vsel %vm234, 1, 0
      %v1535 = vsel %vm235, 1, 0
      %v1536 = vsel %vm236, 1, 0
      %v1537 = vsel %vm237, 1, 0
      %v1538 = vsel %vm238, 1, 0
      %v1539 = vsel %vm239, 1, 0
      %v1540 = vsel %vm240, 1, 0
      %v1541 = vsel %vm241, 1, 0
      %v1542 = vsel %vm242, 1, 0
      %v1543 = vsel %vm243, 1, 0
      %v1544 = vsel %vm244, 1, 0
      %v1545 = vsel %vm245, 1, 0
      %v1546 = vsel %vm246, 1, 0
      %v1547 = vsel %vm247, 1, 0
      %v1548 = vsel %vm248, 1, 0
      %v1549 = vsel %vm249, 1, 0
      %v1550 = vsel %vm250, 1, 0
      %v1551 = vsel %vm251, 1, 0
      %v1552 = vsel %vm252, 1, 0
      %v1553 = vsel %vm253, 1, 0
      %v1554 = vsel %vm254, 1, 0
      %v1555 = vsel %vm255, 1, 0
      %v1556 = vsel %vm256, 1, 0
      %v1557 = vsel %vm257, 1, 0
      %v1558 = vsel %vm258, 1, 0
      %v1559 = vsel %vm259, 1, 0
      %v1560 = vsel %vm260, 1, 0
      %v1561 = vsel %vm261, 1, 0
      %v1562 = vsel %vm262, 1, 0
      %v1563 = vsel %vm263, 1, 0
      %v1564 = vsel %vm264, 1, 0
      %v1565 = vsel %vm265, 1, 0
      %v1566 = vsel %vm266, 1, 0
      %v1567 = vsel %vm267, 1, 0
      %v1568 = vsel %vm268, 1, 0
      %v1569 = vsel %vm269, 1, 0
      %v1570 = vsel %vm270, 1, 0
      %v1571 = vsel %vm271, 1, 0
      %v1572 = vsel %vm272, 1, 0
      %v1573 = vsel %vm273, 1, 0
      %v1574 = vsel %vm274, 1, 0
      %v1575 = vsel %vm275, 1, 0
      %v1576 = vcvt.s32.f32 %v1520
      %v1577 = vcvt.s32.f32 %v1521
      %v1578 = vcvt.s32.f32 %v1522
      %v1579 = vcvt.s32.f32 %v1523
      %v1580 = vcvt.s32.f32 %v1524
      %v1581 = vcvt.s32.f32 %v1525
      %v1582 = vcvt.s32.f32 %v1526
      %v1583 = vcvt.s32.f32 %v1527
      %v1584 = vcvt.s32.f32 %v1528
      %v1585 = vcvt.s32.f32 %v1529
      %v1586 = vcvt.s32.f32 %v1530
      %v1587 = vcvt.s32.f32 %v1531
      %v1588 = vcvt.s32.f32 %v1532
      %v1589 = vcvt.s32.f32 %v1533
      %v1590 = vcvt.s32.f32 %v1534
      %v1591 = vcvt.s32.f32 %v1535
      %v1592 = vcvt.s32.f32 %v1536
      %v1593 = vcvt.s32.f32 %v1537
      %v1594 = vcvt.s32.f32 %v1538
      %v1595 = vcvt.s32.f32 %v1539
      %v1596 = vcvt.s32.f32 %v1540
      %v1597 = vcvt.s32.f32 %v1541
      %v1598 = vcvt.s32.f32 %v1542
      %v1599 = vcvt.s32.f32 %v1543
      %v1600 = vcvt.s32.f32 %v1544
      %v1601 = vcvt.s32.f32 %v1545
      %v1602 = vcvt.s32.f32 %v1546
      %v1603 = vcvt.s32.f32 %v1547
      %v1604 = vcvt.s32.f32 %v1548
      %v1605 = vcvt.s32.f32 %v1549
      %v1606 = vcvt.s32.f32 %v1550
      %v1607 = vcvt.s32.f32 %v1551
      %v1608 = vcvt.s32.f32 %v1552
      %v1609 = vcvt.s32.f32 %v1553
      %v1610 = vcvt.s32.f32 %v1554
      %v1611 = vcvt.s32.f32 %v1555
      %v1612 = vcvt.s32.f32 %v1556
      %v1613 = vcvt.s32.f32 %v1557
      %v1614 = vcvt.s32.f32 %v1558
      %v1615 = vcvt.s32.f32 %v1559
      %v1616 = vcvt.s32.f32 %v1560
      %v1617 = vcvt.s32.f32 %v1561
      %v1618 = vcvt.s32.f32 %v1562
      %v1619 = vcvt.s32.f32 %v1563
      %v1620 = vcvt.s32.f32 %v1564
      %v1621 = vcvt.s32.f32 %v1565
      %v1622 = vcvt.s32.f32 %v1566
      %v1623 = vcvt.s32.f32 %v1567
      %v1624 = vcvt.s32.f32 %v1568
      %v1625 = vcvt.s32.f32 %v1569
      %v1626 = vcvt.s32.f32 %v1570
      %v1627 = vcvt.s32.f32 %v1571
      %v1628 = vcvt.s32.f32 %v1572
      %v1629 = vcvt.s32.f32 %v1573
      %v1630 = vcvt.s32.f32 %v1574
      %v1631 = vcvt.s32.f32 %v1575
      %v1632 = vadd.f32 %v1576, %v1578
      %v1633 = vadd.f32 %v1632, %v1580
      %v1634 = vadd.f32 %v1633, %v1582
      %v1635 = vadd.f32 %v1634, %v1584
      %v1636 = vadd.f32 %v1635, %v1586
      %v1637 = vadd.f32 %v1636, %v1588
      %v1638 = vadd.f32 %v1637, %v1590
      %v1639 = vadd.f32 %v1638, %v1592
      %v1640 = vadd.f32 %v1639, %v1594
      %v1641 = vadd.f32 %v1640, %v1596
      %v1642 = vadd.f32 %v1641, %v1598
      %v1643 = vadd.f32 %v1642, %v1600
      %v1644 = vadd.f32 %v1643, %v1602
      %v1645 = vadd.f32 %v1644, %v1604
      %v1646 = vadd.f32 %v1645, %v1606
      %v1647 = vadd.f32 %v1646, %v1608
      %v1648 = vadd.f32 %v1647, %v1610
      %v1649 = vadd.f32 %v1648, %v1612
      %v1650 = vadd.f32 %v1649, %v1614
      %v1651 = vadd.f32 %v1650, %v1616
      %v1652 = vadd.f32 %v1651, %v1618
      %v1653 = vadd.f32 %v1652, %v1620
      %v1654 = vadd.f32 %v1653, %v1622
      %v1655 = vadd.f32 %v1654, %v1624
      %v1656 = vadd.f32 %v1655, %v1626
      %v1657 = vadd.f32 %v1656, %v1628
      %v1658 = vadd.f32 %v1657, %v1630
      %v1659 = vadd.f32 %v1577, %v1579
      %v1660 = vadd.f32 %v1659, %v1581
      %v1661 = vadd.f32 %v1660, %v1583
      %v1662 = vadd.f32 %v1661, %v1585
      %v1663 = vadd.f32 %v1662, %v1587
      %v1664 = vadd.f32 %v1663, %v1589
      %v1665 = vadd.f32 %v1664, %v1591
      %v1666 = vadd.f32 %v1665, %v1593
      %v1667 = vadd.f32 %v1666, %v1595
      %v1668 = vadd.f32 %v1667, %v1597
      %v1669 = vadd.f32 %v1668, %v1599
      %v1670 = vadd.f32 %v1669, %v1601
      %v1671 = vadd.f32 %v1670, %v1603
      %v1672 = vadd.f32 %v1671, %v1605
      %v1673 = vadd.f32 %v1672, %v1607
      %v1674 = vadd.f32 %v1673, %v1609
      %v1675 = vadd.f32 %v1674, %v1611
      %v1676 = vadd.f32 %v1675, %v1613
      %v1677 = vadd.f32 %v1676, %v1615
      %v1678 = vadd.f32 %v1677, %v1617
      %v1679 = vadd.f32 %v1678, %v1619
      %v1680 = vadd.f32 %v1679, %v1621
      %v1681 = vadd.f32 %v1680, %v1623
      %v1682 = vadd.f32 %v1681, %v1625
      %v1683 = vadd.f32 %v1682, %v1627
      %v1684 = vadd.f32 %v1683, %v1629
      %v1685 = vadd.f32 %v1684, %v1631
      %v1686 = vadd.f32 %v1518, %v1658
      %v1687 = vadd.f32 %v1519, %v1685
      %1688 = vst [vmem:[#allocation5] sm:$0xff] %v1686
      %1689 = vst [vmem:[#allocation5 + $0x8] sm:$0xff] %v1687
    $region29: #{tpu_custom_call.1} parent=1 // pred_fallthru
      _
    // Predicated region
    $region30: #{tpu_custom_call.1} parent=1 // pred_check
      %p1690 = pneg %p40
    $region31: #{tpu_custom_call.1} parent=1 // pred_check_branch
      %1692 = sbr.rel (%p1690) target = $region33
    $region32: #{tpu_custom_call.1} parent=1 // pred_region
      %v1693 = vld [vmem:[#allocation2] sm:$0xff]
      %v1694 = vld [vmem:[#allocation2 + $0x8] sm:$0xff]
      %v1695 = vadd.f32 %v1693, %v1694
      %1696 = vadd.xlane.f32.xlu0 %v1695
      %v1697 = vpop.xlane.xlu0 %1696
      %v1698 = vrot.slane %v1697, 4
      %v1699 = vadd.f32 %v1697, %v1698
      %v1700 = vrot.slane %v1699, 2
      %v1701 = vadd.f32 %v1699, %v1700
      %v1702 = vrot.slane %v1701, 1
      %v1703 = vadd.f32 %v1701, %v1702
      %s1704 = vtos %v1703
      %s1705 = scalar_lea.smem [#allocation11], 0
      %1706 = sst [smem:[%s1705]] %s1704
      %v1707 = vld [vmem:[#allocation3] sm:$0xff]
      %v1708 = vld [vmem:[#allocation3 + $0x8] sm:$0xff]
      %v1709 = vadd.f32 %v1707, %v1708
      %1710 = vadd.xlane.f32.xlu0 %v1709
      %v1711 = vpop.xlane.xlu0 %1710
      %v1712 = vrot.slane %v1711, 4
      %v1713 = vadd.f32 %v1711, %v1712
      %v1714 = vrot.slane %v1713, 2
      %v1715 = vadd.f32 %v1713, %v1714
      %v1716 = vrot.slane %v1715, 1
      %v1717 = vadd.f32 %v1715, %v1716
      %s1718 = vtos %v1717
      %s1719 = scalar_lea.smem [#allocation11], 1
      %1720 = sst [smem:[%s1719]] %s1718
      %v1721 = vld [vmem:[#allocation4] sm:$0xff]
      %v1722 = vld [vmem:[#allocation4 + $0x8] sm:$0xff]
      %v1723 = vadd.f32 %v1721, %v1722
      %1724 = vadd.xlane.f32.xlu0 %v1723
      %v1725 = vpop.xlane.xlu0 %1724
      %v1726 = vrot.slane %v1725, 4
      %v1727 = vadd.f32 %v1725, %v1726
      %v1728 = vrot.slane %v1727, 2
      %v1729 = vadd.f32 %v1727, %v1728
      %v1730 = vrot.slane %v1729, 1
      %v1731 = vadd.f32 %v1729, %v1730
      %s1732 = vtos %v1731
      %s1733 = scalar_lea.smem [#allocation11], 2
      %1734 = sst [smem:[%s1733]] %s1732
      %v1735 = vld [vmem:[#allocation5] sm:$0xff]
      %v1736 = vld [vmem:[#allocation5 + $0x8] sm:$0xff]
      %v1737 = vadd.f32 %v1735, %v1736
      %1738 = vadd.xlane.f32.xlu0 %v1737
      %v1739 = vpop.xlane.xlu0 %1738
      %v1740 = vrot.slane %v1739, 4
      %v1741 = vadd.f32 %v1739, %v1740
      %v1742 = vrot.slane %v1741, 2
      %v1743 = vadd.f32 %v1741, %v1742
      %v1744 = vrot.slane %v1743, 1
      %v1745 = vadd.f32 %v1743, %v1744
      %s1746 = vtos %v1745
      %s1747 = scalar_lea.smem [#allocation11], 3
      %1748 = sst [smem:[%s1747]] %s1746
    $region33: #{tpu_custom_call.1} parent=1 // pred_fallthru
      _
    // Predicated region
    $region34: #{tpu_custom_call.1} parent=1 // pred_check
      _
    $region35: #{tpu_custom_call.1} parent=1 // pred_check_branch
      %1750 = sbr.rel (0) target = $region37
    $region36: #{tpu_custom_call.1} parent=1 // pred_region
      %s1752 = ssub.s32 16, 16
      %1753 = vsyncadd [#allocation8], %s1752
      %1756 = dma.smem_to_hbm [#allocation11], 16, %s2, [#allocation8]
    $region37: #{tpu_custom_call.1} parent=1 // pred_fallthru
      _
    // Predicated region
    $region38: #{tpu_custom_call.1} parent=1 // pred_check
      _
    $region39: #{tpu_custom_call.1} parent=1 // pred_check_branch
      %1758 = sbr.rel (0) target = $region41
    $region40: #{tpu_custom_call.1} parent=1 // pred_region
      %1759 = dma.done [#allocation8], 16
    $region41: #{tpu_custom_call.1} parent=1 // pred_fallthru
      _
    %1760 = sfence
    %1761 = vsyncpa [#allocation7], 1
    %1762 = vsyncpa [#allocation10], 1
    %1763 = vsyncpa [#allocation8], 1

</llo_original>
